<compile_context>
chip_gen: v6e
topology: v6e:2x2x1
jax: 0.10.0
libtpu: 0.0.40
codegen_flags: <defaults>
</compile_context>

<pallas_src>
import jax
import jax.numpy as jnp
from jax.experimental import pallas as pl
from jax.experimental.pallas import tpu as pltpu


# ----------------------------------------------------------------------------
# The ".to(device)" move.
# ----------------------------------------------------------------------------
def device_move(x):
    """Equivalent of `arg.to(device)`.

    In JAX the array already lives on the default (TPU) device, so this is a
    no-op; the actual HBM->VMEM staging happens inside the wrapped module's
    pipelined pallas_call (the BlockSpec DMA *is* the move)."""
    return jnp.asarray(x)


# ----------------------------------------------------------------------------
# Wrapped module's forward (nn.Linear: y = x @ W^T + b) — tiled Pallas matmul.
# ----------------------------------------------------------------------------
def _linear_kernel_f32out(x_ref, w_ref, b_ref, o_ref):
    """Output dtype is f32: accumulate directly into the resident output block
    (no scratch).  Bias is the accumulator init at k==0."""
    k = pl.program_id(2)

    @pl.when(k == 0)
    def _():
        o_ref[...] = jnp.broadcast_to(b_ref[...], o_ref.shape)

    o_ref[...] += jnp.dot(
        x_ref[...], w_ref[...], preferred_element_type=jnp.float32
    )


def _linear_kernel_acc(x_ref, w_ref, b_ref, o_ref, acc_ref):
    """Low-precision output: keep an f32 VMEM accumulator, cast once in the
    k==last epilogue (single wide lane-dense store)."""
    k = pl.program_id(2)

    @pl.when(k == 0)
    def _():
        acc_ref[...] = jnp.broadcast_to(
            b_ref[...].astype(jnp.float32), acc_ref.shape
        )

    acc_ref[...] += jnp.dot(
        x_ref[...], w_ref[...], preferred_element_type=jnp.float32
    )

    @pl.when(k == pl.num_programs(2) - 1)
    def _():
        o_ref[...] = acc_ref[...].astype(o_ref.dtype)


def _divisible_tile(dim, target):
    """Largest multiple of 128 that divides `dim` and is <= target, or `dim`
    itself when dim <= target (a full-extent block is always legal)."""
    if dim <= target:
        return dim
    t = min(target, dim)
    t -= t % 128
    while t > 128 and dim % t:
        t -= 128
    if t >= 128 and dim % t == 0:
        return t
    return dim  # last resort: full-extent block


def wrapped_linear(x, w_t, b, *, compute_dtype=jnp.bfloat16, out_dtype=None):
    """y = x @ w_t + b.

    x   : [M, K]
    w_t : [K, N]   (PyTorch Linear weight [out, in] transposed)
    b   : [1, N]

    Operands are cast to bf16 (MXU peak path on v5e/v6e/v7x); accumulation and
    bias stay f32.  Tiles are chosen generation-aware: prefer >=256 MN tiles
    (fill the 256x256 MXU), long K tiles (arithmetic intensity, fewer grid
    steps), capped by the chip's physical VMEM with headroom.
    """
    M, K = x.shape
    K2, N = w_t.shape
    assert K == K2 and b.shape == (1, N)
    out_dtype = out_dtype or x.dtype

    xc = x.astype(compute_dtype)
    wc = w_t.astype(compute_dtype)
    bf = b.astype(jnp.float32)

    in_item = jnp.dtype(compute_dtype).itemsize
    out_item = jnp.dtype(out_dtype).itemsize
    direct_acc = jnp.dtype(out_dtype) == jnp.dtype(jnp.float32)

    # --- generation awareness ------------------------------------------------
    try:
        phys_vmem = int(pltpu.get_tpu_info().vmem_capacity_bytes)
    except Exception:  # pragma: no cover - conservative (v7x-sized) fallback
        phys_vmem = 64 << 20
    # Leave headroom for Mosaic's own scratch / pipeline bookkeeping.
    vmem_budget = min(int(phys_vmem * 0.75), 100 << 20)

    try:
        device_kind = jax.devices()[0].device_kind.lower()
    except Exception:  # pragma: no cover
        device_kind = ""
    is_v5e = ("v5 lite" in device_kind) or ("v5e" in device_kind) or ("v5litepod" in device_kind)
    in_buf_count = 3 if is_v5e else 2  # deeper buffering on low-BW v5e

    # --- tile selection -------------------------------------------------------
    def fits(tm, tn, tk):
        dbuf_in = in_buf_count * (tm * tk + tk * tn) * in_item  # x + W^T
        bias = 2 * tn * 4
        outs = 2 * tm * tn * out_item
        acc = 0 if direct_acc else tm * tn * 4
        return dbuf_in + bias + outs + acc <= vmem_budget

    def select_tiles():
        for mn in (512, 384, 256, 128):
            tm_c = _divisible_tile(M, mn)
            tn_c = _divisible_tile(N, mn)
            for kk in (2048, 1024, 512, 256, 128):
                tk_c = _divisible_tile(K, kk)
                if fits(tm_c, tn_c, tk_c):
                    return tm_c, tn_c, tk_c
        return (_divisible_tile(M, 128), _divisible_tile(N, 128),
                _divisible_tile(K, 128))

    tm, tn, tk = select_tiles()

    # v7x megacore: expose >= 2 iterations on the parallel (i, j) axes so both
    # TensorCores get work.  Harmless on single-TC v5e/v6e.
    if (M // tm) * (N // tn) < 2:
        if tn >= 256 and (tn // 2) % 128 == 0 and N % (tn // 2) == 0:
            tn //= 2
        elif tm >= 256 and (tm // 2) % 128 == 0 and M % (tm // 2) == 0:
            tm //= 2

    assert M % tm == 0 and N % tn == 0 and K % tk == 0, (
        "shapes must be divisible by the selected tile sizes"
    )
    grid = (M // tm, N // tn, K // tk)

    # Corrected bytes_accessed: x is re-streamed N/tn times, W^T M/tm times.
    cost = pl.CostEstimate(
        flops=2 * M * N * K,
        bytes_accessed=(
            M * K * in_item * (N // tn)
            + K * N * in_item * (M // tm)
            + M * N * out_item
            + N * 4
        ),
        transcendentals=0,
    )

    if is_v5e:
        x_spec = pl.BlockSpec((tm, tk), lambda i, j, k: (i, k),
                              pipeline_mode=pl.Buffered(3))
        w_spec = pl.BlockSpec((tk, tn), lambda i, j, k: (k, j),
                              pipeline_mode=pl.Buffered(3))
    else:
        x_spec = pl.BlockSpec((tm, tk), lambda i, j, k: (i, k))
        w_spec = pl.BlockSpec((tk, tn), lambda i, j, k: (k, j))
    b_spec = pl.BlockSpec((1, tn), lambda i, j, k: (0, j))

    if direct_acc:
        kernel = _linear_kernel_f32out
        scratch = []
    else:
        kernel = _linear_kernel_acc
        scratch = [pltpu.VMEM((tm, tn), jnp.float32)]

    return pl.pallas_call(
        kernel,
        out_shape=jax.ShapeDtypeStruct((M, N), out_dtype),
        grid_spec=pltpu.PrefetchScalarGridSpec(
            num_scalar_prefetch=0,
            grid=grid,
            in_specs=[x_spec, w_spec, b_spec],
            out_specs=pl.BlockSpec((tm, tn), lambda i, j, k: (i, j)),
            scratch_shapes=scratch,
        ),
        compiler_params=pltpu.CompilerParams(
            dimension_semantics=("parallel", "parallel", "arbitrary"),
            vmem_limit_bytes=int(vmem_budget),
        ),
        cost_estimate=cost,
    )(xc, wc, bf)


# ----------------------------------------------------------------------------
# DeviceMover equivalent
# ----------------------------------------------------------------------------
class DeviceMoverJAX:
    """Moves tensor args to device (no-op on an already-resident JAX array;
    the wrapped kernel's BlockSpec DMA performs the staging) and then applies
    the wrapped module (here: a Linear implemented as a tiled Pallas matmul)."""

    def __init__(self, w_t, b):
        # Parameters of the wrapped module already live on device.
        self.w_t = device_move(w_t)
        self.b = device_move(b)

    def __call__(self, *args, **kwargs):
        args = [device_move(a) if isinstance(a, jnp.ndarray) else a for a in args]
        kwargs = {
            k: device_move(v) if isinstance(v, jnp.ndarray) else v
            for k, v in kwargs.items()
        }
        (x,) = args
        return wrapped_linear(x, self.w_t, self.b)


# ----------------------------------------------------------------------------
# Pure-JAX reference (same bf16 operand rounding, f32 accumulation)
# ----------------------------------------------------------------------------
def _ref(x, w_t, b):
    xb = x.astype(jnp.bfloat16).astype(jnp.float32)
    wb = w_t.astype(jnp.bfloat16).astype(jnp.float32)
    return jnp.dot(xb, wb, precision=jax.lax.Precision.HIGHEST) + b


if __name__ == "__main__":
    # Lane-dense test shapes (multiples of 128) so the kernel is exercised with
    # unmasked stores, a filled MXU tile and >=2 parallel grid iterations,
    # while staying small (<1 MiB of inputs).
    seq, d_in, d_out = 256, 512, 512

    key = jax.random.PRNGKey(0)
    kx, kw, kb = jax.random.split(key, 3)
    x = jax.random.normal(kx, (seq, d_in), dtype=jnp.float32)
    # deterministic init of the wrapped Linear(d_in, d_out)
    w = jax.random.normal(kw, (d_out, d_in), dtype=jnp.float32) * 0.02  # [out, in]
    b = jax.random.normal(kb, (d_out,), dtype=jnp.float32) * 0.01

    w_t = w.T                     # [in, out] for the kernel
    b2d = b.reshape(1, d_out)     # 2-D, lane-dense bias

    mover = DeviceMoverJAX(w_t, b2d)
    out = jax.block_until_ready(mover(x))

    ref = _ref(x, w_t, b2d)
    assert out.shape == (seq, d_out)
    assert out.dtype == x.dtype
    assert jnp.allclose(out, ref, atol=2e-3, rtol=2e-3)

    print("KERNEL_OK")
</pallas_src>

<mosaic_0001>
module attributes {stable_mosaic.version = 11 : i64} {
  func.func @_linear_kernel_f32out(%arg0: i32, %arg1: i32, %arg2: i32, %arg3: memref<256x512xbf16, #tpu.memory_space<vmem>>, %arg4: memref<512x256xbf16, #tpu.memory_space<vmem>>, %arg5: memref<1x256xf32, #tpu.memory_space<vmem>>, %arg6: memref<256x256xf32, #tpu.memory_space<vmem>>) attributes {dimension_semantics = [#tpu.dimension_semantics<parallel>, #tpu.dimension_semantics<parallel>, #tpu.dimension_semantics<arbitrary>], iteration_bounds = array<i64: 1, 2, 1>, scalar_prefetch = 0 : i64, scratch_operands = 0 : i64, tpu.core_type = #tpu.core_type<tc>, window_params = [{transform_indices = @transform_0, window_bounds = array<i64: 256, 512>}, {transform_indices = @transform_1, window_bounds = array<i64: 512, 256>}, {transform_indices = @transform_2, window_bounds = array<i64: 1, 256>}, {transform_indices = @transform_3, window_bounds = array<i64: 256, 256>}]} {
    %c0_i32 = arith.constant 0 : i32
    %0 = arith.cmpi eq, %arg2, %c0_i32 : i32
    %1 = arith.extui %0 : i1 to i32
    %c0_i32_0 = arith.constant 0 : i32
    %2 = arith.cmpi ne, %1, %c0_i32_0 : i32
    scf.if %2 {
      %c0_8 = arith.constant 0 : index
      %c0_9 = arith.constant 0 : index
      %9 = vector.load %arg5[%c0_8, %c0_9] : memref<1x256xf32, #tpu.memory_space<vmem>>, vector<1x256xf32>
      %10 = vector.shape_cast %9 : vector<1x256xf32> to vector<1x256xf32>
      %11 = vector.broadcast %10 : vector<1x256xf32> to vector<256x256xf32>
      %c0_10 = arith.constant 0 : index
      %c0_11 = arith.constant 0 : index
      %12 = vector.load %arg6[%c0_10, %c0_11] : memref<256x256xf32, #tpu.memory_space<vmem>>, vector<256x256xf32>
      tpu.vector_store %arg6[%c0_10, %c0_11], %11 {strides = array<i32>} : memref<256x256xf32, #tpu.memory_space<vmem>>, vector<256x256xf32>,
    } else {
    }
    %c0 = arith.constant 0 : index
    %c0_1 = arith.constant 0 : index
    %3 = vector.load %arg6[%c0, %c0_1] : memref<256x256xf32, #tpu.memory_space<vmem>>, vector<256x256xf32>
    %c0_2 = arith.constant 0 : index
    %c0_3 = arith.constant 0 : index
    %4 = vector.load %arg3[%c0_2, %c0_3] : memref<256x512xbf16, #tpu.memory_space<vmem>>, vector<256x512xbf16>
    %c0_4 = arith.constant 0 : index
    %c0_5 = arith.constant 0 : index
    %5 = vector.load %arg4[%c0_4, %c0_5] : memref<512x256xbf16, #tpu.memory_space<vmem>>, vector<512x256xbf16>
    %cst = arith.constant dense<0.000000e+00> : vector<256x256xf32>
    %6 = tpu.matmul %4, %5, %cst {dimension_numbers = #tpu.dot_dimension_numbers<[1], [0], [0], [1], [0, 0, 1, 1], [], []>} : vector<256x512xbf16>, vector<512x256xbf16>, vector<256x256xf32> -> vector<256x256xf32>
    %7 = arith.addf %3, %6 : vector<256x256xf32>
    %c0_6 = arith.constant 0 : index
    %c0_7 = arith.constant 0 : index
    %8 = vector.load %arg6[%c0_6, %c0_7] : memref<256x256xf32, #tpu.memory_space<vmem>>, vector<256x256xf32>
    tpu.vector_store %arg6[%c0_6, %c0_7], %7 {strides = array<i32>} : memref<256x256xf32, #tpu.memory_space<vmem>>, vector<256x256xf32>,
    return
  }
  func.func @transform_0(%arg0: i32, %arg1: i32, %arg2: i32) -> (i32, i32) {
    %c0_i32 = arith.constant 0 : i32
    return %arg0, %arg2 : i32, i32
  }
  func.func @transform_1(%arg0: i32, %arg1: i32, %arg2: i32) -> (i32, i32) {
    %c0_i32 = arith.constant 0 : i32
    return %arg2, %arg1 : i32, i32
  }
  func.func @transform_2(%arg0: i32, %arg1: i32, %arg2: i32) -> (i32, i32) {
    %c0_i32 = arith.constant 0 : i32
    %c0_i32_0 = arith.constant 0 : i32
    return %c0_i32, %arg1 : i32, i32
  }
  func.func @transform_3(%arg0: i32, %arg1: i32, %arg2: i32) -> (i32, i32) {
    %c0_i32 = arith.constant 0 : i32
    return %arg0, %arg1 : i32, i32
  }
}

</mosaic_0001>

<llo_original>
// kernel: tpu_custom_call.1
$region0: #{tpu_custom_call.1}
  #allocation0 [shape = 'u32[]', space=smem, size = 0x4, offset = 0x4, fixed_abs, tag = 'smem constant byte address 0x4 - core index']
  #allocation1 [shape = 'u32[144,128]{1,0:T(1,128)}', space=vmem, size = 0x12000, scoped, tag = 'internal scratch']
  %s0 = inlined_call_operand.hbm [shape: bf16[256,512], index: 0, kind: input, shape index: {}]
  %s1 = inlined_call_operand.hbm [shape: bf16[512,512], index: 1, kind: input, shape index: {}]
  %s2 = inlined_call_operand.hbm [shape: f32[1,512], index: 2, kind: input, shape index: {}]
  %s3 = inlined_call_operand.hbm [shape: f32[256,512], index: 3, kind: output, shape index: {}]
  %s4 = sld [smem:[#allocation0]]
  $region61: #{tpu_custom_call.1} parent=0
    _
  %s6 = ssub.s32 1, %s4
  %s7 = scalar_select 0, %s6, %s4
  $region1: #{tpu_custom_call.1} parent=0
    #allocation2 [shape = 'u8[262144]{0}', space=vmem, size = 0x40000, scoped, tag = 'input window, operand 0, single buffered']
    #allocation3 [shape = 's32[2]{0}', space=sflag, size = 0x8, scoped, tag = 'scoped memory for tpu_custom_call.1']
    #allocation4 [shape = 's32[2]{0}', space=sflag, size = 0x8, scoped, tag = 'scoped memory for tpu_custom_call.1']
    #allocation5 [shape = 'u8[524288]{0}', space=vmem, size = 0x80000, scoped, tag = 'input window, operand 1']
    #allocation6 [shape = 's32[2]{0}', space=sflag, size = 0x8, scoped, tag = 'scoped memory for tpu_custom_call.1']
    #allocation7 [shape = 'u8[2048]{0}', space=vmem, size = 0x800, scoped, tag = 'input window, operand 2']
    #allocation8 [shape = 'u8[524288]{0}', space=vmem, size = 0x80000, scoped, tag = 'output window, operand 0']
    %8 = vsyncpa [#allocation3], 0
    %9 = vsyncpa [#allocation6], 0
    %s10 = scalar_lea.sflag [#allocation6], 1
    %11 = vsyncpa %s10, 0
    %12 = vsyncpa [#allocation4], 0
    %s13 = scalar_lea.sflag [#allocation4], 1
    %14 = vsyncpa %s13, 0
    loop: start=0, step=1, limit=4
    $region2: #{tpu_custom_call.1} parent=1 // loop_pre_header
      _
    $region3: #{tpu_custom_call.1} parent=1 // loop_header
      %s16 = sphi 0, %s20
      %p17 = scmp.ge.s32.totalorder %s16, 4
      %s23 = sphi 0, %s42
      %s24 = sphi 0, %s38
      %s25 = sphi 0, %s34
      %s26 = sphi 0, %s23
      %s27 = sphi 0, %s24
      %s28 = sphi 0, %s25
      %s29 = sphi 0, %s26
      %s30 = sphi 0, %s27
      %s31 = sphi 0, %s28
      %s47 = sphi 0, %s49
      %s50 = sphi 0, %s47
      %s51 = sphi 0, %s50
      %s67 = sphi 0, %s51
      %s75 = sphi 0, %s77
      %s78 = sphi 0, %s75
      %s79 = sphi 0, %s78
      %s95 = sphi 0, %s79
      %s101 = sphi 0, %s103
      %s104 = sphi 0, %s101
      %s105 = sphi 0, %s104
      %s121 = sphi 0, %s105
      %s129 = sphi 0, %s131
      %s132 = sphi 0, %s129
      %s133 = sphi 0, %s132
      %s149 = sphi 0, %s133
    $region4: #{tpu_custom_call.1} parent=1 // loop_header_branch
      %19 = sbr.rel (%p17) target = $region8
    $region5: #{tpu_custom_call.1} parent=1 // loop_body
      %s21 = ssub.s32 %s16, 1
      %s22 = ssub.s32 %s16, 2
      %s32 = sadd.s32 1, %s25
      %p33 = scmp.ge.s32.totalorder %s32, 1
      %s34 = scalar_select %p33, 0, %s32
      %s35 = sadd.s32 1, %s24
      %s36 = scalar_select %p33, %s35, %s24
      %p37 = scmp.ge.s32.totalorder %s36, 2
      %s38 = scalar_select %p37, 0, %s36
      %s39 = sadd.s32 1, %s23
      %s40 = scalar_select %p37, %s39, %s23
      %p41 = scmp.ge.s32.totalorder %s40, 1
      %s42 = scalar_select %p41, 0, %s40
      %s43 = ssub.s32 %s23, %s42
      %s44 = ssub.s32 %s25, %s34
      %s45 = sor.u32 %s43, %s44
      %p46 = scmp.eq.s32.totalorder %s45, 0
      %s48 = sadd.s32 %s47, 1
      %s49 = scalar_select %p46, %s47, %s48
      %p52 = pneg %p46
      %p53 = scmp.eq.s32.totalorder %s16, 1
      %p54 = por %p52, %p53
      %p55 = scmp.ne.s32.totalorder %s47, %s50
      %p56 = scmp.eq.s32.totalorder %s16, 0
      %p57 = por %p55, %p56
      %p58 = scmp.ne.s32.totalorder %s47, %s50
      %p59 = scmp.eq.s32.totalorder %s21, 1
      %p60 = por %p58, %p59
      %p61 = scmp.ne.s32.totalorder %s50, %s51
      %p62 = scmp.eq.s32.totalorder %s21, 0
      %p63 = por %p61, %p62
      %p64 = scmp.ne.s32.totalorder %s50, %s51
      %p65 = scmp.eq.s32.totalorder %s22, 1
      %p66 = por %p64, %p65
      %p68 = scmp.ne.s32.totalorder %s51, %s67
      %p69 = scmp.eq.s32.totalorder %s22, 0
      %p70 = por %p68, %p69
      %s71 = ssub.s32 %s25, %s34
      %s72 = ssub.s32 %s24, %s38
      %s73 = sor.u32 %s71, %s72
      %p74 = scmp.eq.s32.totalorder %s73, 0
      %s76 = sadd.s32 %s75, 1
      %s77 = scalar_select %p74, %s75, %s76
      %p80 = pneg %p74
      %p81 = scmp.eq.s32.totalorder %s16, 1
      %p82 = por %p80, %p81
      %p83 = scmp.ne.s32.totalorder %s75, %s78
      %p84 = scmp.eq.s32.totalorder %s16, 0
      %p85 = por %p83, %p84
      %p86 = scmp.ne.s32.totalorder %s75, %s78
      %p87 = scmp.eq.s32.totalorder %s21, 1
      %p88 = por %p86, %p87
      %p89 = scmp.ne.s32.totalorder %s78, %s79
      %p90 = scmp.eq.s32.totalorder %s21, 0
      %p91 = por %p89, %p90
      %p92 = scmp.ne.s32.totalorder %s78, %s79
      %p93 = scmp.eq.s32.totalorder %s22, 1
      %p94 = por %p92, %p93
      %p96 = scmp.ne.s32.totalorder %s79, %s95
      %p97 = scmp.eq.s32.totalorder %s22, 0
      %p98 = por %p96, %p97
      %s99 = ssub.s32 %s24, %s38
      %p100 = scmp.eq.s32.totalorder %s99, 0
      %s102 = sadd.s32 %s101, 1
      %s103 = scalar_select %p100, %s101, %s102
      %p106 = pneg %p100
      %p107 = scmp.eq.s32.totalorder %s16, 1
      %p108 = por %p106, %p107
      %p109 = scmp.ne.s32.totalorder %s101, %s104
      %p110 = scmp.eq.s32.totalorder %s16, 0
      %p111 = por %p109, %p110
      %p112 = scmp.ne.s32.totalorder %s101, %s104
      %p113 = scmp.eq.s32.totalorder %s21, 1
      %p114 = por %p112, %p113
      %p115 = scmp.ne.s32.totalorder %s104, %s105
      %p116 = scmp.eq.s32.totalorder %s21, 0
      %p117 = por %p115, %p116
      %p118 = scmp.ne.s32.totalorder %s104, %s105
      %p119 = scmp.eq.s32.totalorder %s22, 1
      %p120 = por %p118, %p119
      %p122 = scmp.ne.s32.totalorder %s105, %s121
      %p123 = scmp.eq.s32.totalorder %s22, 0
      %p124 = por %p122, %p123
      %s125 = ssub.s32 %s23, %s42
      %s126 = ssub.s32 %s24, %s38
      %s127 = sor.u32 %s125, %s126
      %p128 = scmp.eq.s32.totalorder %s127, 0
      %s130 = sadd.s32 %s129, 1
      %s131 = scalar_select %p128, %s129, %s130
      %p134 = pneg %p128
      %p135 = scmp.eq.s32.totalorder %s16, 1
      %p136 = por %p134, %p135
      %p137 = scmp.ne.s32.totalorder %s129, %s132
      %p138 = scmp.eq.s32.totalorder %s16, 0
      %p139 = por %p137, %p138
      %p140 = scmp.ne.s32.totalorder %s129, %s132
      %p141 = scmp.eq.s32.totalorder %s21, 1
      %p142 = por %p140, %p141
      %p143 = scmp.ne.s32.totalorder %s132, %s133
      %p144 = scmp.eq.s32.totalorder %s21, 0
      %p145 = por %p143, %p144
      %p146 = scmp.ne.s32.totalorder %s132, %s133
      %p147 = scmp.eq.s32.totalorder %s22, 1
      %p148 = por %p146, %p147
      %p150 = scmp.ne.s32.totalorder %s133, %s149
      %p151 = scmp.eq.s32.totalorder %s22, 0
      %p152 = por %p150, %p151
      %p153 = scmp.le.s32.totalorder 1, %s16
      %p154 = scmp.lt.s32.totalorder %s16, 3
      %p155 = pnand %p153, %p154
      %p156 = pneg %p155
      // Predicated region
      $region9: #{tpu_custom_call.1} parent=5 // pred_check
        _
      $region10: #{tpu_custom_call.1} parent=5 // pred_check_branch
        %158 = sbr.rel (%p155) target = $region12
      $region11: #{tpu_custom_call.1} parent=5 // pred_region
        %s159 = ssub.s32 %s16, 1
        // Predicated region
        $region13: #{tpu_custom_call.1} parent=11 // pred_check
          %p160 = pneg %p63
        $region14: #{tpu_custom_call.1} parent=11 // pred_check_branch
          %162 = sbr.rel (%p160) target = $region16
        $region15: #{tpu_custom_call.1} parent=11 // pred_region
          %s163 = smul.u32 32, %s26
          %s164 = smul.u32 4, %s28
          %s166 = ssub.s32 8192, 8192
          %167 = vsyncadd [#allocation3], %s166
          %s168 = smul.addr %s163, 4
          %s169 = sadd.s32 %s164, %s168
          %s170 = smul.addr %s169, 64
          %s171 = scalar_lea.hbm %s0, %s170
          %s172 = sshll.u32 [#allocation2], 4
          %s173 = int_to_ptr.vmem [resolvable:$true] %s172
          %178 = dma.hbm_to_vmem [thread:$0]  %s171, 8192, %s173, [#allocation3], 256, 256, 16
        $region16: #{tpu_custom_call.1} parent=11 // pred_fallthru
          _
      $region12: #{tpu_custom_call.1} parent=5 // pred_fallthru
        _
      %p179 = scmp.lt.s32.totalorder %s16, 2
      // Predicated region
      $region17: #{tpu_custom_call.1} parent=5 // pred_check
        %p180 = pneg %p179
      $region18: #{tpu_custom_call.1} parent=5 // pred_check_branch
        %182 = sbr.rel (%p180) target = $region20
      $region19: #{tpu_custom_call.1} parent=5 // pred_region
        // Predicated region
        $region21: #{tpu_custom_call.1} parent=19 // pred_check
          %p183 = pneg %p85
        $region22: #{tpu_custom_call.1} parent=19 // pred_check_branch
          %185 = sbr.rel (%p183) target = $region24
        $region23: #{tpu_custom_call.1} parent=19 // pred_region
          %s186 = sand.u32 %s16, 1
          %s187 = scalar_lea.sflag [#allocation6], %s186
          %s188 = sand.u32 %s75, 1
          %s189 = smul.addr %s188, 512
          %s190 = scalar_lea.vmem [#allocation5], %s189
          %s191 = smul.u32 64, %s25
          %s192 = smul.u32 2, %s24
          %s194 = ssub.s32 8192, 8192
          %195 = vsyncadd %s187, %s194
          %s196 = smul.addr %s191, 4
          %s197 = sadd.s32 %s192, %s196
          %s198 = smul.addr %s197, 64
          %s199 = scalar_lea.hbm %s1, %s198
          %s200 = sshll.u32 %s190, 4
          %s201 = int_to_ptr.vmem [resolvable:$true] %s200
          %206 = dma.hbm_to_vmem [thread:$0]  %s199, 8192, %s201, %s187, 256, 128, 8
        $region24: #{tpu_custom_call.1} parent=19 // pred_fallthru
          _
        // Predicated region
        $region25: #{tpu_custom_call.1} parent=19 // pred_check
          %p207 = pneg %p111
        $region26: #{tpu_custom_call.1} parent=19 // pred_check_branch
          %209 = sbr.rel (%p207) target = $region28
        $region27: #{tpu_custom_call.1} parent=19 // pred_region
          %s210 = sand.u32 %s16, 1
          %s211 = scalar_lea.sflag [#allocation6], %s210
          %s212 = sand.u32 %s101, 1
          %s213 = smul.addr %s212, 2
          %s214 = scalar_lea.vmem [#allocation7], %s213
          %s215 = smul.u32 2, %s24
          %s217 = ssub.s32 32, 32
          %218 = vsyncadd %s211, %s217
          %s219 = smul.addr %s215, 16
          %s220 = scalar_lea.hbm %s2, %s219
          %s222 = sshll.u32 %s214, 4
          %s223 = int_to_ptr.vmem [resolvable:$true] %s222
          %225 = dma.hbm_to_vmem [thread:$0]  %s220, 32, %s223, %s211
        $region28: #{tpu_custom_call.1} parent=19 // pred_fallthru
          _
      $region20: #{tpu_custom_call.1} parent=5 // pred_fallthru
        _
      %p226 = scmp.le.s32.totalorder 1, %s16
      %p227 = scmp.lt.s32.totalorder %s16, 3
      %p228 = pnand %p226, %p227
      %p229 = pneg %p228
      // Predicated region
      $region29: #{tpu_custom_call.1} parent=5 // pred_check
        _
      $region30: #{tpu_custom_call.1} parent=5 // pred_check_branch
        %231 = sbr.rel (%p228) target = $region32
      $region31: #{tpu_custom_call.1} parent=5 // pred_region
        %s232 = ssub.s32 %s16, 1
        // Predicated region
        $region33: #{tpu_custom_call.1} parent=31 // pred_check
          %p233 = pneg %p63
        $region34: #{tpu_custom_call.1} parent=31 // pred_check_branch
          %235 = sbr.rel (%p233) target = $region36
        $region35: #{tpu_custom_call.1} parent=31 // pred_region
          %236 = dma.done [#allocation3], 8192
        $region36: #{tpu_custom_call.1} parent=31 // pred_fallthru
          _
        %s237 = sand.u32 %s21, 1
        %s238 = scalar_lea.sflag [#allocation6], %s237
        %s239 = sand.u32 %s78, 1
        %s240 = smul.addr %s239, 512
        %s241 = scalar_lea.vmem [#allocation5], %s240
        // Predicated region
        $region37: #{tpu_custom_call.1} parent=31 // pred_check
          %p242 = pneg %p91
        $region38: #{tpu_custom_call.1} parent=31 // pred_check_branch
          %244 = sbr.rel (%p242) target = $region40
        $region39: #{tpu_custom_call.1} parent=31 // pred_region
          %245 = dma.done %s238, 8192
        $region40: #{tpu_custom_call.1} parent=31 // pred_fallthru
          _
        %s246 = sand.u32 %s21, 1
        %s247 = scalar_lea.sflag [#allocation6], %s246
        %s248 = sand.u32 %s104, 1
        %s249 = smul.addr %s248, 2
        %s250 = scalar_lea.vmem [#allocation7], %s249
        // Predicated region
        $region41: #{tpu_custom_call.1} parent=31 // pred_check
          %p251 = pneg %p117
        $region42: #{tpu_custom_call.1} parent=31 // pred_check_branch
          %253 = sbr.rel (%p251) target = $region44
        $region43: #{tpu_custom_call.1} parent=31 // pred_region
          %254 = dma.done %s247, 32
        $region44: #{tpu_custom_call.1} parent=31 // pred_fallthru
          _
        %p255 = pneg %p63
        %p256 = pneg %p60
        %s257 = sand.u32 %s21, 1
        %s258 = scalar_lea.sflag [#allocation6], %s257
        %s259 = sand.u32 %s78, 1
        %s260 = smul.addr %s259, 512
        %s261 = scalar_lea.vmem [#allocation5], %s260
        %p262 = pneg %p91
        %p263 = pneg %p88
        %s264 = sand.u32 %s21, 1
        %s265 = scalar_lea.sflag [#allocation6], %s264
        %s266 = sand.u32 %s104, 1
        %s267 = smul.addr %s266, 2
        %s268 = scalar_lea.vmem [#allocation7], %s267
        %p269 = pneg %p117
        %p270 = pneg %p114
        %p271 = pneg %p145
        %p272 = pneg %p142
        %s273 = sand.u32 %s132, 1
        %s274 = scalar_lea.sflag [#allocation4], %s273
        %s275 = sand.u32 %s132, 1
        %s276 = smul.addr %s275, 512
        %s277 = scalar_lea.vmem [#allocation8], %s276
        %s278 = smul.u32 32, %s26
        %s279 = smul.u32 4, %s28
        %s280 = smul.u32 64, %s28
        %s281 = smul.u32 2, %s27
        %s282 = smul.u32 2, %s27
        %s283 = smul.u32 32, %s26
        %s284 = smul.u32 2, %s27
        %p285 = scmp.eq.s32.totalorder %s28, 0
        // Predicated region
        $region45: #{tpu_custom_call.1} parent=31 // pred_check
          %p286 = pneg %p285
        $region46: #{tpu_custom_call.1} parent=31 // pred_check_branch
          %288 = sbr.rel (%p286) target = $region48
        $region47: #{tpu_custom_call.1} parent=31 // pred_region
          %v289 = vld [vmem:[%s250] sm:$0x3]
          %v291 = vlaneseq
          %v292 = vshrl.u32 %v291, 7
          %v293 = vsub.s32 0, %v292
          %v294 = vrot.slane %v289, %v293
          %v295 = vlaneseq
          %v296 = vshrl.u32 %v295, 7
          %v297 = vsub.s32 1, %v296
          %v298 = vrot.slane %v289, %v297
          %301 = vst [vmem:[%s277] sm:$0xff] %v294
          %302 = vst [vmem:[%s277 + $0x8] sm:$0xff] %v298
          %303 = vst [vmem:[%s277 + $0x10] sm:$0xff] %v294
          %304 = vst [vmem:[%s277 + $0x18] sm:$0xff] %v298
          %305 = vst [vmem:[%s277 + $0x20] sm:$0xff] %v294
          %306 = vst [vmem:[%s277 + $0x28] sm:$0xff] %v298
          %307 = vst [vmem:[%s277 + $0x30] sm:$0xff] %v294
          %308 = vst [vmem:[%s277 + $0x38] sm:$0xff] %v298
          %309 = vst [vmem:[%s277 + $0x40] sm:$0xff] %v294
          %310 = vst [vmem:[%s277 + $0x48] sm:$0xff] %v298
          %311 = vst [vmem:[%s277 + $0x50] sm:$0xff] %v294
          %312 = vst [vmem:[%s277 + $0x58] sm:$0xff] %v298
          %313 = vst [vmem:[%s277 + $0x60] sm:$0xff] %v294
          %314 = vst [vmem:[%s277 + $0x68] sm:$0xff] %v298
          %315 = vst [vmem:[%s277 + $0x70] sm:$0xff] %v294
          %316 = vst [vmem:[%s277 + $0x78] sm:$0xff] %v298
          %317 = vst [vmem:[%s277 + $0x80] sm:$0xff] %v294
          %318 = vst [vmem:[%s277 + $0x88] sm:$0xff] %v298
          %319 = vst [vmem:[%s277 + $0x90] sm:$0xff] %v294
          %320 = vst [vmem:[%s277 + $0x98] sm:$0xff] %v298
          %321 = vst [vmem:[%s277 + $0xa0] sm:$0xff] %v294
          %322 = vst [vmem:[%s277 + $0xa8] sm:$0xff] %v298
          %323 = vst [vmem:[%s277 + $0xb0] sm:$0xff] %v294
          %324 = vst [vmem:[%s277 + $0xb8] sm:$0xff] %v298
          %325 = vst [vmem:[%s277 + $0xc0] sm:$0xff] %v294
          %326 = vst [vmem:[%s277 + $0xc8] sm:$0xff] %v298
          %327 = vst [vmem:[%s277 + $0xd0] sm:$0xff] %v294
          %328 = vst [vmem:[%s277 + $0xd8] sm:$0xff] %v298
          %329 = vst [vmem:[%s277 + $0xe0] sm:$0xff] %v294
          %330 = vst [vmem:[%s277 + $0xe8] sm:$0xff] %v298
          %331 = vst [vmem:[%s277 + $0xf0] sm:$0xff] %v294
          %332 = vst [vmem:[%s277 + $0xf8] sm:$0xff] %v298
          %333 = vst [vmem:[%s277 + $0x100] sm:$0xff] %v294
          %334 = vst [vmem:[%s277 + $0x108] sm:$0xff] %v298
          %335 = vst [vmem:[%s277 + $0x110] sm:$0xff] %v294
          %336 = vst [vmem:[%s277 + $0x118] sm:$0xff] %v298
          %337 = vst [vmem:[%s277 + $0x120] sm:$0xff] %v294
          %338 = vst [vmem:[%s277 + $0x128] sm:$0xff] %v298
          %339 = vst [vmem:[%s277 + $0x130] sm:$0xff] %v294
          %340 = vst [vmem:[%s277 + $0x138] sm:$0xff] %v298
          %341 = vst [vmem:[%s277 + $0x140] sm:$0xff] %v294
          %342 = vst [vmem:[%s277 + $0x148] sm:$0xff] %v298
          %343 = vst [vmem:[%s277 + $0x150] sm:$0xff] %v294
          %344 = vst [vmem:[%s277 + $0x158] sm:$0xff] %v298
          %345 = vst [vmem:[%s277 + $0x160] sm:$0xff] %v294
          %346 = vst [vmem:[%s277 + $0x168] sm:$0xff] %v298
          %347 = vst [vmem:[%s277 + $0x170] sm:$0xff] %v294
          %348 = vst [vmem:[%s277 + $0x178] sm:$0xff] %v298
          %349 = vst [vmem:[%s277 + $0x180] sm:$0xff] %v294
          %350 = vst [vmem:[%s277 + $0x188] sm:$0xff] %v298
          %351 = vst [vmem:[%s277 + $0x190] sm:$0xff] %v294
          %352 = vst [vmem:[%s277 + $0x198] sm:$0xff] %v298
          %353 = vst [vmem:[%s277 + $0x1a0] sm:$0xff] %v294
          %354 = vst [vmem:[%s277 + $0x1a8] sm:$0xff] %v298
          %355 = vst [vmem:[%s277 + $0x1b0] sm:$0xff] %v294
          %356 = vst [vmem:[%s277 + $0x1b8] sm:$0xff] %v298
          %357 = vst [vmem:[%s277 + $0x1c0] sm:$0xff] %v294
          %358 = vst [vmem:[%s277 + $0x1c8] sm:$0xff] %v298
          %359 = vst [vmem:[%s277 + $0x1d0] sm:$0xff] %v294
          %360 = vst [vmem:[%s277 + $0x1d8] sm:$0xff] %v298
          %361 = vst [vmem:[%s277 + $0x1e0] sm:$0xff] %v294
          %362 = vst [vmem:[%s277 + $0x1e8] sm:$0xff] %v298
          %363 = vst [vmem:[%s277 + $0x1f0] sm:$0xff] %v294
          %364 = vst [vmem:[%s277 + $0x1f8] sm:$0xff] %v298
        $region48: #{tpu_custom_call.1} parent=31 // pred_fallthru
          _
        %v365 = vld [vmem:[%s277] sm:$0xff]
        %v366 = vld [vmem:[%s277 + $0x8] sm:$0xff]
        %v367 = vld [vmem:[%s277 + $0x10] sm:$0xff]
        %v368 = vld [vmem:[%s277 + $0x18] sm:$0xff]
        %v369 = vld [vmem:[%s277 + $0x20] sm:$0xff]
        %v370 = vld [vmem:[%s277 + $0x28] sm:$0xff]
        %v371 = vld [vmem:[%s277 + $0x30] sm:$0xff]
        %v372 = vld [vmem:[%s277 + $0x38] sm:$0xff]
        %v373 = vld [vmem:[%s277 + $0x40] sm:$0xff]
        %v374 = vld [vmem:[%s277 + $0x48] sm:$0xff]
        %v375 = vld [vmem:[%s277 + $0x50] sm:$0xff]
        %v376 = vld [vmem:[%s277 + $0x58] sm:$0xff]
        %v377 = vld [vmem:[%s277 + $0x60] sm:$0xff]
        %v378 = vld [vmem:[%s277 + $0x68] sm:$0xff]
        %v379 = vld [vmem:[%s277 + $0x70] sm:$0xff]
        %v380 = vld [vmem:[%s277 + $0x78] sm:$0xff]
        %v381 = vld [vmem:[%s277 + $0x80] sm:$0xff]
        %v382 = vld [vmem:[%s277 + $0x88] sm:$0xff]
        %v383 = vld [vmem:[%s277 + $0x90] sm:$0xff]
        %v384 = vld [vmem:[%s277 + $0x98] sm:$0xff]
        %v385 = vld [vmem:[%s277 + $0xa0] sm:$0xff]
        %v386 = vld [vmem:[%s277 + $0xa8] sm:$0xff]
        %v387 = vld [vmem:[%s277 + $0xb0] sm:$0xff]
        %v388 = vld [vmem:[%s277 + $0xb8] sm:$0xff]
        %v389 = vld [vmem:[%s277 + $0xc0] sm:$0xff]
        %v390 = vld [vmem:[%s277 + $0xc8] sm:$0xff]
        %v391 = vld [vmem:[%s277 + $0xd0] sm:$0xff]
        %v392 = vld [vmem:[%s277 + $0xd8] sm:$0xff]
        %v393 = vld [vmem:[%s277 + $0xe0] sm:$0xff]
        %v394 = vld [vmem:[%s277 + $0xe8] sm:$0xff]
        %v395 = vld [vmem:[%s277 + $0xf0] sm:$0xff]
        %v396 = vld [vmem:[%s277 + $0xf8] sm:$0xff]
        %v397 = vld [vmem:[%s277 + $0x100] sm:$0xff]
        %v398 = vld [vmem:[%s277 + $0x108] sm:$0xff]
        %v399 = vld [vmem:[%s277 + $0x110] sm:$0xff]
        %v400 = vld [vmem:[%s277 + $0x118] sm:$0xff]
        %v401 = vld [vmem:[%s277 + $0x120] sm:$0xff]
        %v402 = vld [vmem:[%s277 + $0x128] sm:$0xff]
        %v403 = vld [vmem:[%s277 + $0x130] sm:$0xff]
        %v404 = vld [vmem:[%s277 + $0x138] sm:$0xff]
        %v405 = vld [vmem:[%s277 + $0x140] sm:$0xff]
        %v406 = vld [vmem:[%s277 + $0x148] sm:$0xff]
        %v407 = vld [vmem:[%s277 + $0x150] sm:$0xff]
        %v408 = vld [vmem:[%s277 + $0x158] sm:$0xff]
        %v409 = vld [vmem:[%s277 + $0x160] sm:$0xff]
        %v410 = vld [vmem:[%s277 + $0x168] sm:$0xff]
        %v411 = vld [vmem:[%s277 + $0x170] sm:$0xff]
        %v412 = vld [vmem:[%s277 + $0x178] sm:$0xff]
        %v413 = vld [vmem:[%s277 + $0x180] sm:$0xff]
        %v414 = vld [vmem:[%s277 + $0x188] sm:$0xff]
        %v415 = vld [vmem:[%s277 + $0x190] sm:$0xff]
        %v416 = vld [vmem:[%s277 + $0x198] sm:$0xff]
        %v417 = vld [vmem:[%s277 + $0x1a0] sm:$0xff]
        %v418 = vld [vmem:[%s277 + $0x1a8] sm:$0xff]
        %v419 = vld [vmem:[%s277 + $0x1b0] sm:$0xff]
        %v420 = vld [vmem:[%s277 + $0x1b8] sm:$0xff]
        %v421 = vld [vmem:[%s277 + $0x1c0] sm:$0xff]
        %v422 = vld [vmem:[%s277 + $0x1c8] sm:$0xff]
        %v423 = vld [vmem:[%s277 + $0x1d0] sm:$0xff]
        %v424 = vld [vmem:[%s277 + $0x1d8] sm:$0xff]
        %v425 = vld [vmem:[%s277 + $0x1e0] sm:$0xff]
        %v426 = vld [vmem:[%s277 + $0x1e8] sm:$0xff]
        %v427 = vld [vmem:[%s277 + $0x1f0] sm:$0xff]
        %v428 = vld [vmem:[%s277 + $0x1f8] sm:$0xff]
        %v429 = vld [vmem:[#allocation2] sm:$0xff]
        %v430 = vld [vmem:[#allocation2 + $0x8] sm:$0xff]
        %v431 = vld [vmem:[#allocation2 + $0x10] sm:$0xff]
        %v432 = vld [vmem:[#allocation2 + $0x18] sm:$0xff]
        %v433 = vld [vmem:[#allocation2 + $0x20] sm:$0xff]
        %v434 = vld [vmem:[#allocation2 + $0x28] sm:$0xff]
        %v435 = vld [vmem:[#allocation2 + $0x30] sm:$0xff]
        %v436 = vld [vmem:[#allocation2 + $0x38] sm:$0xff]
        %v437 = vld [vmem:[#allocation2 + $0x40] sm:$0xff]
        %v438 = vld [vmem:[#allocation2 + $0x48] sm:$0xff]
        %v439 = vld [vmem:[#allocation2 + $0x50] sm:$0xff]
        %v440 = vld [vmem:[#allocation2 + $0x58] sm:$0xff]
        %v441 = vld [vmem:[#allocation2 + $0x60] sm:$0xff]
        %v442 = vld [vmem:[#allocation2 + $0x68] sm:$0xff]
        %v443 = vld [vmem:[#allocation2 + $0x70] sm:$0xff]
        %v444 = vld [vmem:[#allocation2 + $0x78] sm:$0xff]
        %v445 = vld [vmem:[#allocation2 + $0x80] sm:$0xff]
        %v446 = vld [vmem:[#allocation2 + $0x88] sm:$0xff]
        %v447 = vld [vmem:[#allocation2 + $0x90] sm:$0xff]
        %v448 = vld [vmem:[#allocation2 + $0x98] sm:$0xff]
        %v449 = vld [vmem:[#allocation2 + $0xa0] sm:$0xff]
        %v450 = vld [vmem:[#allocation2 + $0xa8] sm:$0xff]
        %v451 = vld [vmem:[#allocation2 + $0xb0] sm:$0xff]
        %v452 = vld [vmem:[#allocation2 + $0xb8] sm:$0xff]
        %v453 = vld [vmem:[#allocation2 + $0xc0] sm:$0xff]
        %v454 = vld [vmem:[#allocation2 + $0xc8] sm:$0xff]
        %v455 = vld [vmem:[#allocation2 + $0xd0] sm:$0xff]
        %v456 = vld [vmem:[#allocation2 + $0xd8] sm:$0xff]
        %v457 = vld [vmem:[#allocation2 + $0xe0] sm:$0xff]
        %v458 = vld [vmem:[#allocation2 + $0xe8] sm:$0xff]
        %v459 = vld [vmem:[#allocation2 + $0xf0] sm:$0xff]
        %v460 = vld [vmem:[#allocation2 + $0xf8] sm:$0xff]
        %v461 = vld [vmem:[#allocation2 + $0x100] sm:$0xff]
        %v462 = vld [vmem:[#allocation2 + $0x108] sm:$0xff]
        %v463 = vld [vmem:[#allocation2 + $0x110] sm:$0xff]
        %v464 = vld [vmem:[#allocation2 + $0x118] sm:$0xff]
        %v465 = vld [vmem:[#allocation2 + $0x120] sm:$0xff]
        %v466 = vld [vmem:[#allocation2 + $0x128] sm:$0xff]
        %v467 = vld [vmem:[#allocation2 + $0x130] sm:$0xff]
        %v468 = vld [vmem:[#allocation2 + $0x138] sm:$0xff]
        %v469 = vld [vmem:[#allocation2 + $0x140] sm:$0xff]
        %v470 = vld [vmem:[#allocation2 + $0x148] sm:$0xff]
        %v471 = vld [vmem:[#allocation2 + $0x150] sm:$0xff]
        %v472 = vld [vmem:[#allocation2 + $0x158] sm:$0xff]
        %v473 = vld [vmem:[#allocation2 + $0x160] sm:$0xff]
        %v474 = vld [vmem:[#allocation2 + $0x168] sm:$0xff]
        %v475 = vld [vmem:[#allocation2 + $0x170] sm:$0xff]
        %v476 = vld [vmem:[#allocation2 + $0x178] sm:$0xff]
        %v477 = vld [vmem:[#allocation2 + $0x180] sm:$0xff]
        %v478 = vld [vmem:[#allocation2 + $0x188] sm:$0xff]
        %v479 = vld [vmem:[#allocation2 + $0x190] sm:$0xff]
        %v480 = vld [vmem:[#allocation2 + $0x198] sm:$0xff]
        %v481 = vld [vmem:[#allocation2 + $0x1a0] sm:$0xff]
        %v482 = vld [vmem:[#allocation2 + $0x1a8] sm:$0xff]
        %v483 = vld [vmem:[#allocation2 + $0x1b0] sm:$0xff]
        %v484 = vld [vmem:[#allocation2 + $0x1b8] sm:$0xff]
        %v485 = vld [vmem:[#allocation2 + $0x1c0] sm:$0xff]
        %v486 = vld [vmem:[#allocation2 + $0x1c8] sm:$0xff]
        %v487 = vld [vmem:[#allocation2 + $0x1d0] sm:$0xff]
        %v488 = vld [vmem:[#allocation2 + $0x1d8] sm:$0xff]
        %v489 = vld [vmem:[#allocation2 + $0x1e0] sm:$0xff]
        %v490 = vld [vmem:[#allocation2 + $0x1e8] sm:$0xff]
        %v491 = vld [vmem:[#allocation2 + $0x1f0] sm:$0xff]
        %v492 = vld [vmem:[#allocation2 + $0x1f8] sm:$0xff]
        %v493 = vld [vmem:[%s241] sm:$0xff]
        %v494 = vld [vmem:[%s241 + $0x8] sm:$0xff]
        %v495 = vld [vmem:[%s241 + $0x10] sm:$0xff]
        %v496 = vld [vmem:[%s241 + $0x18] sm:$0xff]
        %v497 = vld [vmem:[%s241 + $0x20] sm:$0xff]
        %v498 = vld [vmem:[%s241 + $0x28] sm:$0xff]
        %v499 = vld [vmem:[%s241 + $0x30] sm:$0xff]
        %v500 = vld [vmem:[%s241 + $0x38] sm:$0xff]
        %v501 = vld [vmem:[%s241 + $0x40] sm:$0xff]
        %v502 = vld [vmem:[%s241 + $0x48] sm:$0xff]
        %v503 = vld [vmem:[%s241 + $0x50] sm:$0xff]
        %v504 = vld [vmem:[%s241 + $0x58] sm:$0xff]
        %v505 = vld [vmem:[%s241 + $0x60] sm:$0xff]
        %v506 = vld [vmem:[%s241 + $0x68] sm:$0xff]
        %v507 = vld [vmem:[%s241 + $0x70] sm:$0xff]
        %v508 = vld [vmem:[%s241 + $0x78] sm:$0xff]
        %v509 = vld [vmem:[%s241 + $0x80] sm:$0xff]
        %v510 = vld [vmem:[%s241 + $0x88] sm:$0xff]
        %v511 = vld [vmem:[%s241 + $0x90] sm:$0xff]
        %v512 = vld [vmem:[%s241 + $0x98] sm:$0xff]
        %v513 = vld [vmem:[%s241 + $0xa0] sm:$0xff]
        %v514 = vld [vmem:[%s241 + $0xa8] sm:$0xff]
        %v515 = vld [vmem:[%s241 + $0xb0] sm:$0xff]
        %v516 = vld [vmem:[%s241 + $0xb8] sm:$0xff]
        %v517 = vld [vmem:[%s241 + $0xc0] sm:$0xff]
        %v518 = vld [vmem:[%s241 + $0xc8] sm:$0xff]
        %v519 = vld [vmem:[%s241 + $0xd0] sm:$0xff]
        %v520 = vld [vmem:[%s241 + $0xd8] sm:$0xff]
        %v521 = vld [vmem:[%s241 + $0xe0] sm:$0xff]
        %v522 = vld [vmem:[%s241 + $0xe8] sm:$0xff]
        %v523 = vld [vmem:[%s241 + $0xf0] sm:$0xff]
        %v524 = vld [vmem:[%s241 + $0xf8] sm:$0xff]
        %v525 = vld [vmem:[%s241 + $0x100] sm:$0xff]
        %v526 = vld [vmem:[%s241 + $0x108] sm:$0xff]
        %v527 = vld [vmem:[%s241 + $0x110] sm:$0xff]
        %v528 = vld [vmem:[%s241 + $0x118] sm:$0xff]
        %v529 = vld [vmem:[%s241 + $0x120] sm:$0xff]
        %v530 = vld [vmem:[%s241 + $0x128] sm:$0xff]
        %v531 = vld [vmem:[%s241 + $0x130] sm:$0xff]
        %v532 = vld [vmem:[%s241 + $0x138] sm:$0xff]
        %v533 = vld [vmem:[%s241 + $0x140] sm:$0xff]
        %v534 = vld [vmem:[%s241 + $0x148] sm:$0xff]
        %v535 = vld [vmem:[%s241 + $0x150] sm:$0xff]
        %v536 = vld [vmem:[%s241 + $0x158] sm:$0xff]
        %v537 = vld [vmem:[%s241 + $0x160] sm:$0xff]
        %v538 = vld [vmem:[%s241 + $0x168] sm:$0xff]
        %v539 = vld [vmem:[%s241 + $0x170] sm:$0xff]
        %v540 = vld [vmem:[%s241 + $0x178] sm:$0xff]
        %v541 = vld [vmem:[%s241 + $0x180] sm:$0xff]
        %v542 = vld [vmem:[%s241 + $0x188] sm:$0xff]
        %v543 = vld [vmem:[%s241 + $0x190] sm:$0xff]
        %v544 = vld [vmem:[%s241 + $0x198] sm:$0xff]
        %v545 = vld [vmem:[%s241 + $0x1a0] sm:$0xff]
        %v546 = vld [vmem:[%s241 + $0x1a8] sm:$0xff]
        %v547 = vld [vmem:[%s241 + $0x1b0] sm:$0xff]
        %v548 = vld [vmem:[%s241 + $0x1b8] sm:$0xff]
        %v549 = vld [vmem:[%s241 + $0x1c0] sm:$0xff]
        %v550 = vld [vmem:[%s241 + $0x1c8] sm:$0xff]
        %v551 = vld [vmem:[%s241 + $0x1d0] sm:$0xff]
        %v552 = vld [vmem:[%s241 + $0x1d8] sm:$0xff]
        %v553 = vld [vmem:[%s241 + $0x1e0] sm:$0xff]
        %v554 = vld [vmem:[%s241 + $0x1e8] sm:$0xff]
        %v555 = vld [vmem:[%s241 + $0x1f0] sm:$0xff]
        %v556 = vld [vmem:[%s241 + $0x1f8] sm:$0xff]
        %v621 = vunpack.c.l.b16 %v429
        %v622 = vunpack.c.h.b16 %v429
        %v623 = vunpack.c.l.b16 %v430
        %v624 = vunpack.c.h.b16 %v430
        %v625 = vunpack.c.l.b16 %v431
        %v626 = vunpack.c.h.b16 %v431
        %v627 = vunpack.c.l.b16 %v432
        %v628 = vunpack.c.h.b16 %v432
        %v629 = vunpack.c.l.b16 %v433
        %v630 = vunpack.c.h.b16 %v433
        %v631 = vunpack.c.l.b16 %v434
        %v632 = vunpack.c.h.b16 %v434
        %v633 = vunpack.c.l.b16 %v435
        %v634 = vunpack.c.h.b16 %v435
        %v635 = vunpack.c.l.b16 %v436
        %v636 = vunpack.c.h.b16 %v436
        %v637 = vunpack.c.l.b16 %v437
        %v638 = vunpack.c.h.b16 %v437
        %v639 = vunpack.c.l.b16 %v438
        %v640 = vunpack.c.h.b16 %v438
        %v641 = vunpack.c.l.b16 %v439
        %v642 = vunpack.c.h.b16 %v439
        %v643 = vunpack.c.l.b16 %v440
        %v644 = vunpack.c.h.b16 %v440
        %v645 = vunpack.c.l.b16 %v441
        %v646 = vunpack.c.h.b16 %v441
        %v647 = vunpack.c.l.b16 %v442
        %v648 = vunpack.c.h.b16 %v442
        %v649 = vunpack.c.l.b16 %v443
        %v650 = vunpack.c.h.b16 %v443
        %v651 = vunpack.c.l.b16 %v444
        %v652 = vunpack.c.h.b16 %v444
        %v653 = vunpack.c.l.b16 %v445
        %v654 = vunpack.c.h.b16 %v445
        %v655 = vunpack.c.l.b16 %v446
        %v656 = vunpack.c.h.b16 %v446
        %v657 = vunpack.c.l.b16 %v447
        %v658 = vunpack.c.h.b16 %v447
        %v659 = vunpack.c.l.b16 %v448
        %v660 = vunpack.c.h.b16 %v448
        %v661 = vunpack.c.l.b16 %v449
        %v662 = vunpack.c.h.b16 %v449
        %v663 = vunpack.c.l.b16 %v450
        %v664 = vunpack.c.h.b16 %v450
        %v665 = vunpack.c.l.b16 %v451
        %v666 = vunpack.c.h.b16 %v451
        %v667 = vunpack.c.l.b16 %v452
        %v668 = vunpack.c.h.b16 %v452
        %v669 = vunpack.c.l.b16 %v453
        %v670 = vunpack.c.h.b16 %v453
        %v671 = vunpack.c.l.b16 %v454
        %v672 = vunpack.c.h.b16 %v454
        %v673 = vunpack.c.l.b16 %v455
        %v674 = vunpack.c.h.b16 %v455
        %v675 = vunpack.c.l.b16 %v456
        %v676 = vunpack.c.h.b16 %v456
        %v677 = vunpack.c.l.b16 %v457
        %v678 = vunpack.c.h.b16 %v457
        %v679 = vunpack.c.l.b16 %v458
        %v680 = vunpack.c.h.b16 %v458
        %v681 = vunpack.c.l.b16 %v459
        %v682 = vunpack.c.h.b16 %v459
        %v683 = vunpack.c.l.b16 %v460
        %v684 = vunpack.c.h.b16 %v460
        %v685 = vunpack.c.l.b16 %v461
        %v686 = vunpack.c.h.b16 %v461
        %v687 = vunpack.c.l.b16 %v462
        %v688 = vunpack.c.h.b16 %v462
        %v689 = vunpack.c.l.b16 %v463
        %v690 = vunpack.c.h.b16 %v463
        %v691 = vunpack.c.l.b16 %v464
        %v692 = vunpack.c.h.b16 %v464
        %v693 = vunpack.c.l.b16 %v465
        %v694 = vunpack.c.h.b16 %v465
        %v695 = vunpack.c.l.b16 %v466
        %v696 = vunpack.c.h.b16 %v466
        %v697 = vunpack.c.l.b16 %v467
        %v698 = vunpack.c.h.b16 %v467
        %v699 = vunpack.c.l.b16 %v468
        %v700 = vunpack.c.h.b16 %v468
        %v701 = vunpack.c.l.b16 %v469
        %v702 = vunpack.c.h.b16 %v469
        %v703 = vunpack.c.l.b16 %v470
        %v704 = vunpack.c.h.b16 %v470
        %v705 = vunpack.c.l.b16 %v471
        %v706 = vunpack.c.h.b16 %v471
        %v707 = vunpack.c.l.b16 %v472
        %v708 = vunpack.c.h.b16 %v472
        %v709 = vunpack.c.l.b16 %v473
        %v710 = vunpack.c.h.b16 %v473
        %v711 = vunpack.c.l.b16 %v474
        %v712 = vunpack.c.h.b16 %v474
        %v713 = vunpack.c.l.b16 %v475
        %v714 = vunpack.c.h.b16 %v475
        %v715 = vunpack.c.l.b16 %v476
        %v716 = vunpack.c.h.b16 %v476
        %v717 = vunpack.c.l.b16 %v477
        %v718 = vunpack.c.h.b16 %v477
        %v719 = vunpack.c.l.b16 %v478
        %v720 = vunpack.c.h.b16 %v478
        %v721 = vunpack.c.l.b16 %v479
        %v722 = vunpack.c.h.b16 %v479
        %v723 = vunpack.c.l.b16 %v480
        %v724 = vunpack.c.h.b16 %v480
        %v725 = vunpack.c.l.b16 %v481
        %v726 = vunpack.c.h.b16 %v481
        %v727 = vunpack.c.l.b16 %v482
        %v728 = vunpack.c.h.b16 %v482
        %v729 = vunpack.c.l.b16 %v483
        %v730 = vunpack.c.h.b16 %v483
        %v731 = vunpack.c.l.b16 %v484
        %v732 = vunpack.c.h.b16 %v484
        %v733 = vunpack.c.l.b16 %v485
        %v734 = vunpack.c.h.b16 %v485
        %v735 = vunpack.c.l.b16 %v486
        %v736 = vunpack.c.h.b16 %v486
        %v737 = vunpack.c.l.b16 %v487
        %v738 = vunpack.c.h.b16 %v487
        %v739 = vunpack.c.l.b16 %v488
        %v740 = vunpack.c.h.b16 %v488
        %v741 = vunpack.c.l.b16 %v489
        %v742 = vunpack.c.h.b16 %v489
        %v743 = vunpack.c.l.b16 %v490
        %v744 = vunpack.c.h.b16 %v490
        %v745 = vunpack.c.l.b16 %v491
        %v746 = vunpack.c.h.b16 %v491
        %v747 = vunpack.c.l.b16 %v492
        %v748 = vunpack.c.h.b16 %v492
        %v749 = vpack.c.b16 %v625, %v621
        %v750 = vpack.c.b16 %v626, %v622
        %v751 = vpack.c.b16 %v627, %v623
        %v752 = vpack.c.b16 %v628, %v624
        %v753 = vpack.c.b16 %v633, %v629
        %v754 = vpack.c.b16 %v634, %v630
        %v755 = vpack.c.b16 %v635, %v631
        %v756 = vpack.c.b16 %v636, %v632
        %v757 = vpack.c.b16 %v641, %v637
        %v758 = vpack.c.b16 %v642, %v638
        %v759 = vpack.c.b16 %v643, %v639
        %v760 = vpack.c.b16 %v644, %v640
        %v761 = vpack.c.b16 %v649, %v645
        %v762 = vpack.c.b16 %v650, %v646
        %v763 = vpack.c.b16 %v651, %v647
        %v764 = vpack.c.b16 %v652, %v648
        %v765 = vpack.c.b16 %v657, %v653
        %v766 = vpack.c.b16 %v658, %v654
        %v767 = vpack.c.b16 %v659, %v655
        %v768 = vpack.c.b16 %v660, %v656
        %v769 = vpack.c.b16 %v665, %v661
        %v770 = vpack.c.b16 %v666, %v662
        %v771 = vpack.c.b16 %v667, %v663
        %v772 = vpack.c.b16 %v668, %v664
        %v773 = vpack.c.b16 %v673, %v669
        %v774 = vpack.c.b16 %v674, %v670
        %v775 = vpack.c.b16 %v675, %v671
        %v776 = vpack.c.b16 %v676, %v672
        %v777 = vpack.c.b16 %v681, %v677
        %v778 = vpack.c.b16 %v682, %v678
        %v779 = vpack.c.b16 %v683, %v679
        %v780 = vpack.c.b16 %v684, %v680
        %v781 = vpack.c.b16 %v689, %v685
        %v782 = vpack.c.b16 %v690, %v686
        %v783 = vpack.c.b16 %v691, %v687
        %v784 = vpack.c.b16 %v692, %v688
        %v785 = vpack.c.b16 %v697, %v693
        %v786 = vpack.c.b16 %v698, %v694
        %v787 = vpack.c.b16 %v699, %v695
        %v788 = vpack.c.b16 %v700, %v696
        %v789 = vpack.c.b16 %v705, %v701
        %v790 = vpack.c.b16 %v706, %v702
        %v791 = vpack.c.b16 %v707, %v703
        %v792 = vpack.c.b16 %v708, %v704
        %v793 = vpack.c.b16 %v713, %v709
        %v794 = vpack.c.b16 %v714, %v710
        %v795 = vpack.c.b16 %v715, %v711
        %v796 = vpack.c.b16 %v716, %v712
        %v797 = vpack.c.b16 %v721, %v717
        %v798 = vpack.c.b16 %v722, %v718
        %v799 = vpack.c.b16 %v723, %v719
        %v800 = vpack.c.b16 %v724, %v720
        %v801 = vpack.c.b16 %v729, %v725
        %v802 = vpack.c.b16 %v730, %v726
        %v803 = vpack.c.b16 %v731, %v727
        %v804 = vpack.c.b16 %v732, %v728
        %v805 = vpack.c.b16 %v737, %v733
        %v806 = vpack.c.b16 %v738, %v734
        %v807 = vpack.c.b16 %v739, %v735
        %v808 = vpack.c.b16 %v740, %v736
        %v809 = vpack.c.b16 %v745, %v741
        %v810 = vpack.c.b16 %v746, %v742
        %v811 = vpack.c.b16 %v747, %v743
        %v812 = vpack.c.b16 %v748, %v744
        %v941 = vunpack.c.l.b16 %v493
        %v942 = vunpack.c.h.b16 %v493
        %v943 = vunpack.c.l.b16 %v494
        %v944 = vunpack.c.h.b16 %v494
        %v945 = vunpack.c.l.b16 %v495
        %v946 = vunpack.c.h.b16 %v495
        %v947 = vunpack.c.l.b16 %v496
        %v948 = vunpack.c.h.b16 %v496
        %v949 = vunpack.c.l.b16 %v497
        %v950 = vunpack.c.h.b16 %v497
        %v951 = vunpack.c.l.b16 %v498
        %v952 = vunpack.c.h.b16 %v498
        %v953 = vunpack.c.l.b16 %v499
        %v954 = vunpack.c.h.b16 %v499
        %v955 = vunpack.c.l.b16 %v500
        %v956 = vunpack.c.h.b16 %v500
        %v957 = vunpack.c.l.b16 %v501
        %v958 = vunpack.c.h.b16 %v501
        %v959 = vunpack.c.l.b16 %v502
        %v960 = vunpack.c.h.b16 %v502
        %v961 = vunpack.c.l.b16 %v503
        %v962 = vunpack.c.h.b16 %v503
        %v963 = vunpack.c.l.b16 %v504
        %v964 = vunpack.c.h.b16 %v504
        %v965 = vunpack.c.l.b16 %v505
        %v966 = vunpack.c.h.b16 %v505
        %v967 = vunpack.c.l.b16 %v506
        %v968 = vunpack.c.h.b16 %v506
        %v969 = vunpack.c.l.b16 %v507
        %v970 = vunpack.c.h.b16 %v507
        %v971 = vunpack.c.l.b16 %v508
        %v972 = vunpack.c.h.b16 %v508
        %v973 = vunpack.c.l.b16 %v509
        %v974 = vunpack.c.h.b16 %v509
        %v975 = vunpack.c.l.b16 %v510
        %v976 = vunpack.c.h.b16 %v510
        %v977 = vunpack.c.l.b16 %v511
        %v978 = vunpack.c.h.b16 %v511
        %v979 = vunpack.c.l.b16 %v512
        %v980 = vunpack.c.h.b16 %v512
        %v981 = vunpack.c.l.b16 %v513
        %v982 = vunpack.c.h.b16 %v513
        %v983 = vunpack.c.l.b16 %v514
        %v984 = vunpack.c.h.b16 %v514
        %v985 = vunpack.c.l.b16 %v515
        %v986 = vunpack.c.h.b16 %v515
        %v987 = vunpack.c.l.b16 %v516
        %v988 = vunpack.c.h.b16 %v516
        %v989 = vunpack.c.l.b16 %v517
        %v990 = vunpack.c.h.b16 %v517
        %v991 = vunpack.c.l.b16 %v518
        %v992 = vunpack.c.h.b16 %v518
        %v993 = vunpack.c.l.b16 %v519
        %v994 = vunpack.c.h.b16 %v519
        %v995 = vunpack.c.l.b16 %v520
        %v996 = vunpack.c.h.b16 %v520
        %v997 = vunpack.c.l.b16 %v521
        %v998 = vunpack.c.h.b16 %v521
        %v999 = vunpack.c.l.b16 %v522
        %v1000 = vunpack.c.h.b16 %v522
        %v1001 = vunpack.c.l.b16 %v523
        %v1002 = vunpack.c.h.b16 %v523
        %v1003 = vunpack.c.l.b16 %v524
        %v1004 = vunpack.c.h.b16 %v524
        %v1005 = vunpack.c.l.b16 %v525
        %v1006 = vunpack.c.h.b16 %v525
        %v1007 = vunpack.c.l.b16 %v526
        %v1008 = vunpack.c.h.b16 %v526
        %v1009 = vunpack.c.l.b16 %v527
        %v1010 = vunpack.c.h.b16 %v527
        %v1011 = vunpack.c.l.b16 %v528
        %v1012 = vunpack.c.h.b16 %v528
        %v1013 = vunpack.c.l.b16 %v529
        %v1014 = vunpack.c.h.b16 %v529
        %v1015 = vunpack.c.l.b16 %v530
        %v1016 = vunpack.c.h.b16 %v530
        %v1017 = vunpack.c.l.b16 %v531
        %v1018 = vunpack.c.h.b16 %v531
        %v1019 = vunpack.c.l.b16 %v532
        %v1020 = vunpack.c.h.b16 %v532
        %v1021 = vunpack.c.l.b16 %v533
        %v1022 = vunpack.c.h.b16 %v533
        %v1023 = vunpack.c.l.b16 %v534
        %v1024 = vunpack.c.h.b16 %v534
        %v1025 = vunpack.c.l.b16 %v535
        %v1026 = vunpack.c.h.b16 %v535
        %v1027 = vunpack.c.l.b16 %v536
        %v1028 = vunpack.c.h.b16 %v536
        %v1029 = vunpack.c.l.b16 %v537
        %v1030 = vunpack.c.h.b16 %v537
        %v1031 = vunpack.c.l.b16 %v538
        %v1032 = vunpack.c.h.b16 %v538
        %v1033 = vunpack.c.l.b16 %v539
        %v1034 = vunpack.c.h.b16 %v539
        %v1035 = vunpack.c.l.b16 %v540
        %v1036 = vunpack.c.h.b16 %v540
        %v1037 = vunpack.c.l.b16 %v541
        %v1038 = vunpack.c.h.b16 %v541
        %v1039 = vunpack.c.l.b16 %v542
        %v1040 = vunpack.c.h.b16 %v542
        %v1041 = vunpack.c.l.b16 %v543
        %v1042 = vunpack.c.h.b16 %v543
        %v1043 = vunpack.c.l.b16 %v544
        %v1044 = vunpack.c.h.b16 %v544
        %v1045 = vunpack.c.l.b16 %v545
        %v1046 = vunpack.c.h.b16 %v545
        %v1047 = vunpack.c.l.b16 %v546
        %v1048 = vunpack.c.h.b16 %v546
        %v1049 = vunpack.c.l.b16 %v547
        %v1050 = vunpack.c.h.b16 %v547
        %v1051 = vunpack.c.l.b16 %v548
        %v1052 = vunpack.c.h.b16 %v548
        %v1053 = vunpack.c.l.b16 %v549
        %v1054 = vunpack.c.h.b16 %v549
        %v1055 = vunpack.c.l.b16 %v550
        %v1056 = vunpack.c.h.b16 %v550
        %v1057 = vunpack.c.l.b16 %v551
        %v1058 = vunpack.c.h.b16 %v551
        %v1059 = vunpack.c.l.b16 %v552
        %v1060 = vunpack.c.h.b16 %v552
        %v1061 = vunpack.c.l.b16 %v553
        %v1062 = vunpack.c.h.b16 %v553
        %v1063 = vunpack.c.l.b16 %v554
        %v1064 = vunpack.c.h.b16 %v554
        %v1065 = vunpack.c.l.b16 %v555
        %v1066 = vunpack.c.h.b16 %v555
        %v1067 = vunpack.c.l.b16 %v556
        %v1068 = vunpack.c.h.b16 %v556
        %v1069 = vpack.c.b16 %v943, %v941
        %v1070 = vpack.c.b16 %v944, %v942
        %v1071 = vpack.c.b16 %v947, %v945
        %v1072 = vpack.c.b16 %v948, %v946
        %v1073 = vpack.c.b16 %v951, %v949
        %v1074 = vpack.c.b16 %v952, %v950
        %v1075 = vpack.c.b16 %v955, %v953
        %v1076 = vpack.c.b16 %v956, %v954
        %v1077 = vpack.c.b16 %v959, %v957
        %v1078 = vpack.c.b16 %v960, %v958
        %v1079 = vpack.c.b16 %v963, %v961
        %v1080 = vpack.c.b16 %v964, %v962
        %v1081 = vpack.c.b16 %v967, %v965
        %v1082 = vpack.c.b16 %v968, %v966
        %v1083 = vpack.c.b16 %v971, %v969
        %v1084 = vpack.c.b16 %v972, %v970
        %v1085 = vpack.c.b16 %v975, %v973
        %v1086 = vpack.c.b16 %v976, %v974
        %v1087 = vpack.c.b16 %v979, %v977
        %v1088 = vpack.c.b16 %v980, %v978
        %v1089 = vpack.c.b16 %v983, %v981
        %v1090 = vpack.c.b16 %v984, %v982
        %v1091 = vpack.c.b16 %v987, %v985
        %v1092 = vpack.c.b16 %v988, %v986
        %v1093 = vpack.c.b16 %v991, %v989
        %v1094 = vpack.c.b16 %v992, %v990
        %v1095 = vpack.c.b16 %v995, %v993
        %v1096 = vpack.c.b16 %v996, %v994
        %v1097 = vpack.c.b16 %v999, %v997
        %v1098 = vpack.c.b16 %v1000, %v998
        %v1099 = vpack.c.b16 %v1003, %v1001
        %v1100 = vpack.c.b16 %v1004, %v1002
        %v1101 = vpack.c.b16 %v1007, %v1005
        %v1102 = vpack.c.b16 %v1008, %v1006
        %v1103 = vpack.c.b16 %v1011, %v1009
        %v1104 = vpack.c.b16 %v1012, %v1010
        %v1105 = vpack.c.b16 %v1015, %v1013
        %v1106 = vpack.c.b16 %v1016, %v1014
        %v1107 = vpack.c.b16 %v1019, %v1017
        %v1108 = vpack.c.b16 %v1020, %v1018
        %v1109 = vpack.c.b16 %v1023, %v1021
        %v1110 = vpack.c.b16 %v1024, %v1022
        %v1111 = vpack.c.b16 %v1027, %v1025
        %v1112 = vpack.c.b16 %v1028, %v1026
        %v1113 = vpack.c.b16 %v1031, %v1029
        %v1114 = vpack.c.b16 %v1032, %v1030
        %v1115 = vpack.c.b16 %v1035, %v1033
        %v1116 = vpack.c.b16 %v1036, %v1034
        %v1117 = vpack.c.b16 %v1039, %v1037
        %v1118 = vpack.c.b16 %v1040, %v1038
        %v1119 = vpack.c.b16 %v1043, %v1041
        %v1120 = vpack.c.b16 %v1044, %v1042
        %v1121 = vpack.c.b16 %v1047, %v1045
        %v1122 = vpack.c.b16 %v1048, %v1046
        %v1123 = vpack.c.b16 %v1051, %v1049
        %v1124 = vpack.c.b16 %v1052, %v1050
        %v1125 = vpack.c.b16 %v1055, %v1053
        %v1126 = vpack.c.b16 %v1056, %v1054
        %v1127 = vpack.c.b16 %v1059, %v1057
        %v1128 = vpack.c.b16 %v1060, %v1058
        %v1129 = vpack.c.b16 %v1063, %v1061
        %v1130 = vpack.c.b16 %v1064, %v1062
        %v1131 = vpack.c.b16 %v1067, %v1065
        %v1132 = vpack.c.b16 %v1068, %v1066
        %1197 = vmatprep.subr.bf16.mxu0 %v1084
        %1198 = vmatpush1.bf16.msra.mxu0 %v1083
        %1199 = vmatprep.subr.bf16.mxu0 %v1082
        %1200 = vmatpush1.bf16.msra.mxu0 %v1081
        %1201 = vmatprep.subr.bf16.mxu0 %v1080
        %1202 = vmatpush1.bf16.msra.mxu0 %v1079
        %1203 = vmatprep.subr.bf16.mxu0 %v1078
        %1204 = vmatpush1.bf16.msra.mxu0 %v1077
        %1205 = vmatprep.subr.bf16.mxu0 %v1076
        %1206 = vmatpush1.bf16.msra.mxu0 %v1075
        %1207 = vmatprep.subr.bf16.mxu0 %v1074
        %1208 = vmatpush1.bf16.msra.mxu0 %v1073
        %1209 = vmatprep.subr.bf16.mxu0 %v1072
        %1210 = vmatpush1.bf16.msra.mxu0 %v1071
        %1211 = vmatprep.subr.bf16.mxu0 %v1070
        %1212 = vmatpush1.bf16.msra.mxu0 %v1069
        %1213 = vmatprep.subr.bf16.mxu0 %v1100
        %1214 = vmatpush2.bf16.msra.mxu0 %v1099
        %1215 = vmatprep.subr.bf16.mxu0 %v1098
        %1216 = vmatpush2.bf16.msra.mxu0 %v1097
        %1217 = vmatprep.subr.bf16.mxu0 %v1096
        %1218 = vmatpush2.bf16.msra.mxu0 %v1095
        %1219 = vmatprep.subr.bf16.mxu0 %v1094
        %1220 = vmatpush2.bf16.msra.mxu0 %v1093
        %1221 = vmatprep.subr.bf16.mxu0 %v1092
        %1222 = vmatpush2.bf16.msra.mxu0 %v1091
        %1223 = vmatprep.subr.bf16.mxu0 %v1090
        %1224 = vmatpush2.bf16.msra.mxu0 %v1089
        %1225 = vmatprep.subr.bf16.mxu0 %v1088
        %1226 = vmatpush2.bf16.msra.mxu0 %v1087
        %1227 = vmatprep.subr.bf16.mxu0 %v1086
        %1228 = vmatpush2.bf16.msra.mxu0 %v1085
        %1229 = vmatprep.mubr.bf16.mxu0 %v750
        %1230 = vmatmul.mubr.bf16.gmra.mxu0 %v749
        %v1231 = vpop.f32.mrf.mxu0
        %v1232 = vadd.f32 0.0, %v1231
        %v1233 = vpop.f32.mrf.mxu0
        %v1234 = vadd.f32 0.0, %v1233
        %v1235 = vpop.f32.mrf.mxu0
        %v1236 = vadd.f32 0.0, %v1235
        %v1237 = vpop.f32.mrf.mxu0
        %v1238 = vadd.f32 0.0, %v1237
        %1239 = vmatprep.mubr.bf16.mxu0 %v754
        %1240 = vmatmul.mubr.bf16.gmra.mxu0 %v753
        %v1241 = vpop.f32.mrf.mxu0
        %v1242 = vadd.f32 0.0, %v1241
        %v1243 = vpop.f32.mrf.mxu0
        %v1244 = vadd.f32 0.0, %v1243
        %v1245 = vpop.f32.mrf.mxu0
        %v1246 = vadd.f32 0.0, %v1245
        %v1247 = vpop.f32.mrf.mxu0
        %v1248 = vadd.f32 0.0, %v1247
        %1249 = vmatprep.mubr.bf16.mxu0 %v758
        %1250 = vmatmul.mubr.bf16.gmra.mxu0 %v757
        %v1251 = vpop.f32.mrf.mxu0
        %v1252 = vadd.f32 0.0, %v1251
        %v1253 = vpop.f32.mrf.mxu0
        %v1254 = vadd.f32 0.0, %v1253
        %v1255 = vpop.f32.mrf.mxu0
        %v1256 = vadd.f32 0.0, %v1255
        %v1257 = vpop.f32.mrf.mxu0
        %v1258 = vadd.f32 0.0, %v1257
        %1259 = vmatprep.mubr.bf16.mxu0 %v762
        %1260 = vmatmul.mubr.bf16.gmra.mxu0 %v761
        %v1261 = vpop.f32.mrf.mxu0
        %v1262 = vadd.f32 0.0, %v1261
        %v1263 = vpop.f32.mrf.mxu0
        %v1264 = vadd.f32 0.0, %v1263
        %v1265 = vpop.f32.mrf.mxu0
        %v1266 = vadd.f32 0.0, %v1265
        %v1267 = vpop.f32.mrf.mxu0
        %v1268 = vadd.f32 0.0, %v1267
        %1269 = vmatprep.mubr.bf16.mxu0 %v766
        %1270 = vmatmul.mubr.bf16.gmra.mxu0 %v765
        %v1271 = vpop.f32.mrf.mxu0
        %v1272 = vadd.f32 0.0, %v1271
        %v1273 = vpop.f32.mrf.mxu0
        %v1274 = vadd.f32 0.0, %v1273
        %v1275 = vpop.f32.mrf.mxu0
        %v1276 = vadd.f32 0.0, %v1275
        %v1277 = vpop.f32.mrf.mxu0
        %v1278 = vadd.f32 0.0, %v1277
        %1279 = vmatprep.mubr.bf16.mxu0 %v770
        %1280 = vmatmul.mubr.bf16.gmra.mxu0 %v769
        %v1281 = vpop.f32.mrf.mxu0
        %v1282 = vadd.f32 0.0, %v1281
        %v1283 = vpop.f32.mrf.mxu0
        %v1284 = vadd.f32 0.0, %v1283
        %v1285 = vpop.f32.mrf.mxu0
        %v1286 = vadd.f32 0.0, %v1285
        %v1287 = vpop.f32.mrf.mxu0
        %v1288 = vadd.f32 0.0, %v1287
        %1289 = vmatprep.mubr.bf16.mxu0 %v774
        %1290 = vmatmul.mubr.bf16.gmra.mxu0 %v773
        %v1291 = vpop.f32.mrf.mxu0
        %v1292 = vadd.f32 0.0, %v1291
        %v1293 = vpop.f32.mrf.mxu0
        %v1294 = vadd.f32 0.0, %v1293
        %v1295 = vpop.f32.mrf.mxu0
        %v1296 = vadd.f32 0.0, %v1295
        %v1297 = vpop.f32.mrf.mxu0
        %v1298 = vadd.f32 0.0, %v1297
        %1299 = vmatprep.mubr.bf16.mxu0 %v778
        %1300 = vmatmul.mubr.bf16.gmra.mxu0 %v777
        %v1301 = vpop.f32.mrf.mxu0
        %v1302 = vadd.f32 0.0, %v1301
        %v1303 = vpop.f32.mrf.mxu0
        %v1304 = vadd.f32 0.0, %v1303
        %v1305 = vpop.f32.mrf.mxu0
        %v1306 = vadd.f32 0.0, %v1305
        %v1307 = vpop.f32.mrf.mxu0
        %v1308 = vadd.f32 0.0, %v1307
        %1309 = vmatprep.mubr.bf16.mxu0 %v782
        %1310 = vmatmul.mubr.bf16.gmra.mxu0 %v781
        %v1311 = vpop.f32.mrf.mxu0
        %v1312 = vadd.f32 0.0, %v1311
        %v1313 = vpop.f32.mrf.mxu0
        %v1314 = vadd.f32 0.0, %v1313
        %v1315 = vpop.f32.mrf.mxu0
        %v1316 = vadd.f32 0.0, %v1315
        %v1317 = vpop.f32.mrf.mxu0
        %v1318 = vadd.f32 0.0, %v1317
        %1319 = vmatprep.mubr.bf16.mxu0 %v786
        %1320 = vmatmul.mubr.bf16.gmra.mxu0 %v785
        %v1321 = vpop.f32.mrf.mxu0
        %v1322 = vadd.f32 0.0, %v1321
        %v1323 = vpop.f32.mrf.mxu0
        %v1324 = vadd.f32 0.0, %v1323
        %v1325 = vpop.f32.mrf.mxu0
        %v1326 = vadd.f32 0.0, %v1325
        %v1327 = vpop.f32.mrf.mxu0
        %v1328 = vadd.f32 0.0, %v1327
        %1329 = vmatprep.mubr.bf16.mxu0 %v790
        %1330 = vmatmul.mubr.bf16.gmra.mxu0 %v789
        %v1331 = vpop.f32.mrf.mxu0
        %v1332 = vadd.f32 0.0, %v1331
        %v1333 = vpop.f32.mrf.mxu0
        %v1334 = vadd.f32 0.0, %v1333
        %v1335 = vpop.f32.mrf.mxu0
        %v1336 = vadd.f32 0.0, %v1335
        %v1337 = vpop.f32.mrf.mxu0
        %v1338 = vadd.f32 0.0, %v1337
        %1339 = vmatprep.mubr.bf16.mxu0 %v794
        %1340 = vmatmul.mubr.bf16.gmra.mxu0 %v793
        %v1341 = vpop.f32.mrf.mxu0
        %v1342 = vadd.f32 0.0, %v1341
        %v1343 = vpop.f32.mrf.mxu0
        %v1344 = vadd.f32 0.0, %v1343
        %v1345 = vpop.f32.mrf.mxu0
        %v1346 = vadd.f32 0.0, %v1345
        %v1347 = vpop.f32.mrf.mxu0
        %v1348 = vadd.f32 0.0, %v1347
        %1349 = vmatprep.mubr.bf16.mxu0 %v798
        %1350 = vmatmul.mubr.bf16.gmra.mxu0 %v797
        %v1351 = vpop.f32.mrf.mxu0
        %v1352 = vadd.f32 0.0, %v1351
        %v1353 = vpop.f32.mrf.mxu0
        %v1354 = vadd.f32 0.0, %v1353
        %v1355 = vpop.f32.mrf.mxu0
        %v1356 = vadd.f32 0.0, %v1355
        %v1357 = vpop.f32.mrf.mxu0
        %v1358 = vadd.f32 0.0, %v1357
        %1359 = vmatprep.mubr.bf16.mxu0 %v802
        %1360 = vmatmul.mubr.bf16.gmra.mxu0 %v801
        %v1361 = vpop.f32.mrf.mxu0
        %v1362 = vadd.f32 0.0, %v1361
        %v1363 = vpop.f32.mrf.mxu0
        %v1364 = vadd.f32 0.0, %v1363
        %v1365 = vpop.f32.mrf.mxu0
        %v1366 = vadd.f32 0.0, %v1365
        %v1367 = vpop.f32.mrf.mxu0
        %v1368 = vadd.f32 0.0, %v1367
        %1369 = vmatprep.mubr.bf16.mxu0 %v806
        %1370 = vmatmul.mubr.bf16.gmra.mxu0 %v805
        %v1371 = vpop.f32.mrf.mxu0
        %v1372 = vadd.f32 0.0, %v1371
        %v1373 = vpop.f32.mrf.mxu0
        %v1374 = vadd.f32 0.0, %v1373
        %v1375 = vpop.f32.mrf.mxu0
        %v1376 = vadd.f32 0.0, %v1375
        %v1377 = vpop.f32.mrf.mxu0
        %v1378 = vadd.f32 0.0, %v1377
        %1379 = vmatprep.mubr.bf16.mxu0 %v810
        %1380 = vmatmul.mubr.bf16.gmra.mxu0 %v809
        %v1381 = vpop.f32.mrf.mxu0
        %v1382 = vadd.f32 0.0, %v1381
        %v1383 = vpop.f32.mrf.mxu0
        %v1384 = vadd.f32 0.0, %v1383
        %v1385 = vpop.f32.mrf.mxu0
        %v1386 = vadd.f32 0.0, %v1385
        %v1387 = vpop.f32.mrf.mxu0
        %v1388 = vadd.f32 0.0, %v1387
        %1389 = vdwg.mxu0
        %1390 = vmatprep.subr.bf16.mxu0 %v1116
        %1391 = vmatpush1.bf16.msra.mxu0 %v1115
        %1392 = vmatprep.subr.bf16.mxu0 %v1114
        %1393 = vmatpush1.bf16.msra.mxu0 %v1113
        %1394 = vmatprep.subr.bf16.mxu0 %v1112
        %1395 = vmatpush1.bf16.msra.mxu0 %v1111
        %1396 = vmatprep.subr.bf16.mxu0 %v1110
        %1397 = vmatpush1.bf16.msra.mxu0 %v1109
        %1398 = vmatprep.subr.bf16.mxu0 %v1108
        %1399 = vmatpush1.bf16.msra.mxu0 %v1107
        %1400 = vmatprep.subr.bf16.mxu0 %v1106
        %1401 = vmatpush1.bf16.msra.mxu0 %v1105
        %1402 = vmatprep.subr.bf16.mxu0 %v1104
        %1403 = vmatpush1.bf16.msra.mxu0 %v1103
        %1404 = vmatprep.subr.bf16.mxu0 %v1102
        %1405 = vmatpush1.bf16.msra.mxu0 %v1101
        %1406 = vmatprep.subr.bf16.mxu0 %v1132
        %1407 = vmatpush2.bf16.msra.mxu0 %v1131
        %1408 = vmatprep.subr.bf16.mxu0 %v1130
        %1409 = vmatpush2.bf16.msra.mxu0 %v1129
        %1410 = vmatprep.subr.bf16.mxu0 %v1128
        %1411 = vmatpush2.bf16.msra.mxu0 %v1127
        %1412 = vmatprep.subr.bf16.mxu0 %v1126
        %1413 = vmatpush2.bf16.msra.mxu0 %v1125
        %1414 = vmatprep.subr.bf16.mxu0 %v1124
        %1415 = vmatpush2.bf16.msra.mxu0 %v1123
        %1416 = vmatprep.subr.bf16.mxu0 %v1122
        %1417 = vmatpush2.bf16.msra.mxu0 %v1121
        %1418 = vmatprep.subr.bf16.mxu0 %v1120
        %1419 = vmatpush2.bf16.msra.mxu0 %v1119
        %1420 = vmatprep.subr.bf16.mxu0 %v1118
        %1421 = vmatpush2.bf16.msra.mxu0 %v1117
        %1422 = vmatprep.mubr.bf16.mxu0 %v752
        %1423 = vmatmul.mubr.bf16.gmra.mxu0 %v751
        %v1424 = vpop.f32.mrf.mxu0
        %v1425 = vadd.f32 %v1232, %v1424
        %v1426 = vpop.f32.mrf.mxu0
        %v1427 = vadd.f32 %v1234, %v1426
        %v1428 = vpop.f32.mrf.mxu0
        %v1429 = vadd.f32 %v1236, %v1428
        %v1430 = vpop.f32.mrf.mxu0
        %v1431 = vadd.f32 %v1238, %v1430
        %1432 = vmatprep.mubr.bf16.mxu0 %v756
        %1433 = vmatmul.mubr.bf16.gmra.mxu0 %v755
        %v1434 = vpop.f32.mrf.mxu0
        %v1435 = vadd.f32 %v1242, %v1434
        %v1436 = vpop.f32.mrf.mxu0
        %v1437 = vadd.f32 %v1244, %v1436
        %v1438 = vpop.f32.mrf.mxu0
        %v1439 = vadd.f32 %v1246, %v1438
        %v1440 = vpop.f32.mrf.mxu0
        %v1441 = vadd.f32 %v1248, %v1440
        %1442 = vmatprep.mubr.bf16.mxu0 %v760
        %1443 = vmatmul.mubr.bf16.gmra.mxu0 %v759
        %v1444 = vpop.f32.mrf.mxu0
        %v1445 = vadd.f32 %v1252, %v1444
        %v1446 = vpop.f32.mrf.mxu0
        %v1447 = vadd.f32 %v1254, %v1446
        %v1448 = vpop.f32.mrf.mxu0
        %v1449 = vadd.f32 %v1256, %v1448
        %v1450 = vpop.f32.mrf.mxu0
        %v1451 = vadd.f32 %v1258, %v1450
        %1452 = vmatprep.mubr.bf16.mxu0 %v764
        %1453 = vmatmul.mubr.bf16.gmra.mxu0 %v763
        %v1454 = vpop.f32.mrf.mxu0
        %v1455 = vadd.f32 %v1262, %v1454
        %v1456 = vpop.f32.mrf.mxu0
        %v1457 = vadd.f32 %v1264, %v1456
        %v1458 = vpop.f32.mrf.mxu0
        %v1459 = vadd.f32 %v1266, %v1458
        %v1460 = vpop.f32.mrf.mxu0
        %v1461 = vadd.f32 %v1268, %v1460
        %1462 = vmatprep.mubr.bf16.mxu0 %v768
        %1463 = vmatmul.mubr.bf16.gmra.mxu0 %v767
        %v1464 = vpop.f32.mrf.mxu0
        %v1465 = vadd.f32 %v1272, %v1464
        %v1466 = vpop.f32.mrf.mxu0
        %v1467 = vadd.f32 %v1274, %v1466
        %v1468 = vpop.f32.mrf.mxu0
        %v1469 = vadd.f32 %v1276, %v1468
        %v1470 = vpop.f32.mrf.mxu0
        %v1471 = vadd.f32 %v1278, %v1470
        %1472 = vmatprep.mubr.bf16.mxu0 %v772
        %1473 = vmatmul.mubr.bf16.gmra.mxu0 %v771
        %v1474 = vpop.f32.mrf.mxu0
        %v1475 = vadd.f32 %v1282, %v1474
        %v1476 = vpop.f32.mrf.mxu0
        %v1477 = vadd.f32 %v1284, %v1476
        %v1478 = vpop.f32.mrf.mxu0
        %v1479 = vadd.f32 %v1286, %v1478
        %v1480 = vpop.f32.mrf.mxu0
        %v1481 = vadd.f32 %v1288, %v1480
        %1482 = vmatprep.mubr.bf16.mxu0 %v776
        %1483 = vmatmul.mubr.bf16.gmra.mxu0 %v775
        %v1484 = vpop.f32.mrf.mxu0
        %v1485 = vadd.f32 %v1292, %v1484
        %v1486 = vpop.f32.mrf.mxu0
        %v1487 = vadd.f32 %v1294, %v1486
        %v1488 = vpop.f32.mrf.mxu0
        %v1489 = vadd.f32 %v1296, %v1488
        %v1490 = vpop.f32.mrf.mxu0
        %v1491 = vadd.f32 %v1298, %v1490
        %1492 = vmatprep.mubr.bf16.mxu0 %v780
        %1493 = vmatmul.mubr.bf16.gmra.mxu0 %v779
        %v1494 = vpop.f32.mrf.mxu0
        %v1495 = vadd.f32 %v1302, %v1494
        %v1496 = vpop.f32.mrf.mxu0
        %v1497 = vadd.f32 %v1304, %v1496
        %v1498 = vpop.f32.mrf.mxu0
        %v1499 = vadd.f32 %v1306, %v1498
        %v1500 = vpop.f32.mrf.mxu0
        %v1501 = vadd.f32 %v1308, %v1500
        %1502 = vmatprep.mubr.bf16.mxu0 %v784
        %1503 = vmatmul.mubr.bf16.gmra.mxu0 %v783
        %v1504 = vpop.f32.mrf.mxu0
        %v1505 = vadd.f32 %v1312, %v1504
        %v1506 = vpop.f32.mrf.mxu0
        %v1507 = vadd.f32 %v1314, %v1506
        %v1508 = vpop.f32.mrf.mxu0
        %v1509 = vadd.f32 %v1316, %v1508
        %v1510 = vpop.f32.mrf.mxu0
        %v1511 = vadd.f32 %v1318, %v1510
        %1512 = vmatprep.mubr.bf16.mxu0 %v788
        %1513 = vmatmul.mubr.bf16.gmra.mxu0 %v787
        %v1514 = vpop.f32.mrf.mxu0
        %v1515 = vadd.f32 %v1322, %v1514
        %v1516 = vpop.f32.mrf.mxu0
        %v1517 = vadd.f32 %v1324, %v1516
        %v1518 = vpop.f32.mrf.mxu0
        %v1519 = vadd.f32 %v1326, %v1518
        %v1520 = vpop.f32.mrf.mxu0
        %v1521 = vadd.f32 %v1328, %v1520
        %1522 = vmatprep.mubr.bf16.mxu0 %v792
        %1523 = vmatmul.mubr.bf16.gmra.mxu0 %v791
        %v1524 = vpop.f32.mrf.mxu0
        %v1525 = vadd.f32 %v1332, %v1524
        %v1526 = vpop.f32.mrf.mxu0
        %v1527 = vadd.f32 %v1334, %v1526
        %v1528 = vpop.f32.mrf.mxu0
        %v1529 = vadd.f32 %v1336, %v1528
        %v1530 = vpop.f32.mrf.mxu0
        %v1531 = vadd.f32 %v1338, %v1530
        %1532 = vmatprep.mubr.bf16.mxu0 %v796
        %1533 = vmatmul.mubr.bf16.gmra.mxu0 %v795
        %v1534 = vpop.f32.mrf.mxu0
        %v1535 = vadd.f32 %v1342, %v1534
        %v1536 = vpop.f32.mrf.mxu0
        %v1537 = vadd.f32 %v1344, %v1536
        %v1538 = vpop.f32.mrf.mxu0
        %v1539 = vadd.f32 %v1346, %v1538
        %v1540 = vpop.f32.mrf.mxu0
        %v1541 = vadd.f32 %v1348, %v1540
        %1542 = vmatprep.mubr.bf16.mxu0 %v800
        %1543 = vmatmul.mubr.bf16.gmra.mxu0 %v799
        %v1544 = vpop.f32.mrf.mxu0
        %v1545 = vadd.f32 %v1352, %v1544
        %v1546 = vpop.f32.mrf.mxu0
        %v1547 = vadd.f32 %v1354, %v1546
        %v1548 = vpop.f32.mrf.mxu0
        %v1549 = vadd.f32 %v1356, %v1548
        %v1550 = vpop.f32.mrf.mxu0
        %v1551 = vadd.f32 %v1358, %v1550
        %1552 = vmatprep.mubr.bf16.mxu0 %v804
        %1553 = vmatmul.mubr.bf16.gmra.mxu0 %v803
        %v1554 = vpop.f32.mrf.mxu0
        %v1555 = vadd.f32 %v1362, %v1554
        %v1556 = vpop.f32.mrf.mxu0
        %v1557 = vadd.f32 %v1364, %v1556
        %v1558 = vpop.f32.mrf.mxu0
        %v1559 = vadd.f32 %v1366, %v1558
        %v1560 = vpop.f32.mrf.mxu0
        %v1561 = vadd.f32 %v1368, %v1560
        %1562 = vmatprep.mubr.bf16.mxu0 %v808
        %1563 = vmatmul.mubr.bf16.gmra.mxu0 %v807
        %v1564 = vpop.f32.mrf.mxu0
        %v1565 = vadd.f32 %v1372, %v1564
        %v1566 = vpop.f32.mrf.mxu0
        %v1567 = vadd.f32 %v1374, %v1566
        %v1568 = vpop.f32.mrf.mxu0
        %v1569 = vadd.f32 %v1376, %v1568
        %v1570 = vpop.f32.mrf.mxu0
        %v1571 = vadd.f32 %v1378, %v1570
        %1572 = vmatprep.mubr.bf16.mxu0 %v812
        %1573 = vmatmul.mubr.bf16.gmra.mxu0 %v811
        %v1574 = vpop.f32.mrf.mxu0
        %v1575 = vadd.f32 %v1382, %v1574
        %v1576 = vpop.f32.mrf.mxu0
        %v1577 = vadd.f32 %v1384, %v1576
        %v1578 = vpop.f32.mrf.mxu0
        %v1579 = vadd.f32 %v1386, %v1578
        %v1580 = vpop.f32.mrf.mxu0
        %v1581 = vadd.f32 %v1388, %v1580
        %1582 = vdwg.mxu0
        %v1583 = vadd.f32 %v365, %v1425
        %v1584 = vadd.f32 %v366, %v1427
        %v1585 = vadd.f32 %v367, %v1429
        %v1586 = vadd.f32 %v368, %v1431
        %v1587 = vadd.f32 %v369, %v1435
        %v1588 = vadd.f32 %v370, %v1437
        %v1589 = vadd.f32 %v371, %v1439
        %v1590 = vadd.f32 %v372, %v1441
        %v1591 = vadd.f32 %v373, %v1445
        %v1592 = vadd.f32 %v374, %v1447
        %v1593 = vadd.f32 %v375, %v1449
        %v1594 = vadd.f32 %v376, %v1451
        %v1595 = vadd.f32 %v377, %v1455
        %v1596 = vadd.f32 %v378, %v1457
        %v1597 = vadd.f32 %v379, %v1459
        %v1598 = vadd.f32 %v380, %v1461
        %v1599 = vadd.f32 %v381, %v1465
        %v1600 = vadd.f32 %v382, %v1467
        %v1601 = vadd.f32 %v383, %v1469
        %v1602 = vadd.f32 %v384, %v1471
        %v1603 = vadd.f32 %v385, %v1475
        %v1604 = vadd.f32 %v386, %v1477
        %v1605 = vadd.f32 %v387, %v1479
        %v1606 = vadd.f32 %v388, %v1481
        %v1607 = vadd.f32 %v389, %v1485
        %v1608 = vadd.f32 %v390, %v1487
        %v1609 = vadd.f32 %v391, %v1489
        %v1610 = vadd.f32 %v392, %v1491
        %v1611 = vadd.f32 %v393, %v1495
        %v1612 = vadd.f32 %v394, %v1497
        %v1613 = vadd.f32 %v395, %v1499
        %v1614 = vadd.f32 %v396, %v1501
        %v1615 = vadd.f32 %v397, %v1505
        %v1616 = vadd.f32 %v398, %v1507
        %v1617 = vadd.f32 %v399, %v1509
        %v1618 = vadd.f32 %v400, %v1511
        %v1619 = vadd.f32 %v401, %v1515
        %v1620 = vadd.f32 %v402, %v1517
        %v1621 = vadd.f32 %v403, %v1519
        %v1622 = vadd.f32 %v404, %v1521
        %v1623 = vadd.f32 %v405, %v1525
        %v1624 = vadd.f32 %v406, %v1527
        %v1625 = vadd.f32 %v407, %v1529
        %v1626 = vadd.f32 %v408, %v1531
        %v1627 = vadd.f32 %v409, %v1535
        %v1628 = vadd.f32 %v410, %v1537
        %v1629 = vadd.f32 %v411, %v1539
        %v1630 = vadd.f32 %v412, %v1541
        %v1631 = vadd.f32 %v413, %v1545
        %v1632 = vadd.f32 %v414, %v1547
        %v1633 = vadd.f32 %v415, %v1549
        %v1634 = vadd.f32 %v416, %v1551
        %v1635 = vadd.f32 %v417, %v1555
        %v1636 = vadd.f32 %v418, %v1557
        %v1637 = vadd.f32 %v419, %v1559
        %v1638 = vadd.f32 %v420, %v1561
        %v1639 = vadd.f32 %v421, %v1565
        %v1640 = vadd.f32 %v422, %v1567
        %v1641 = vadd.f32 %v423, %v1569
        %v1642 = vadd.f32 %v424, %v1571
        %v1643 = vadd.f32 %v425, %v1575
        %v1644 = vadd.f32 %v426, %v1577
        %v1645 = vadd.f32 %v427, %v1579
        %v1646 = vadd.f32 %v428, %v1581
        %1647 = vst [vmem:[%s277] sm:$0xff] %v1583
        %1648 = vst [vmem:[%s277 + $0x8] sm:$0xff] %v1584
        %1649 = vst [vmem:[%s277 + $0x10] sm:$0xff] %v1585
        %1650 = vst [vmem:[%s277 + $0x18] sm:$0xff] %v1586
        %1651 = vst [vmem:[%s277 + $0x20] sm:$0xff] %v1587
        %1652 = vst [vmem:[%s277 + $0x28] sm:$0xff] %v1588
        %1653 = vst [vmem:[%s277 + $0x30] sm:$0xff] %v1589
        %1654 = vst [vmem:[%s277 + $0x38] sm:$0xff] %v1590
        %1655 = vst [vmem:[%s277 + $0x40] sm:$0xff] %v1591
        %1656 = vst [vmem:[%s277 + $0x48] sm:$0xff] %v1592
        %1657 = vst [vmem:[%s277 + $0x50] sm:$0xff] %v1593
        %1658 = vst [vmem:[%s277 + $0x58] sm:$0xff] %v1594
        %1659 = vst [vmem:[%s277 + $0x60] sm:$0xff] %v1595
        %1660 = vst [vmem:[%s277 + $0x68] sm:$0xff] %v1596
        %1661 = vst [vmem:[%s277 + $0x70] sm:$0xff] %v1597
        %1662 = vst [vmem:[%s277 + $0x78] sm:$0xff] %v1598
        %1663 = vst [vmem:[%s277 + $0x80] sm:$0xff] %v1599
        %1664 = vst [vmem:[%s277 + $0x88] sm:$0xff] %v1600
        %1665 = vst [vmem:[%s277 + $0x90] sm:$0xff] %v1601
        %1666 = vst [vmem:[%s277 + $0x98] sm:$0xff] %v1602
        %1667 = vst [vmem:[%s277 + $0xa0] sm:$0xff] %v1603
        %1668 = vst [vmem:[%s277 + $0xa8] sm:$0xff] %v1604
        %1669 = vst [vmem:[%s277 + $0xb0] sm:$0xff] %v1605
        %1670 = vst [vmem:[%s277 + $0xb8] sm:$0xff] %v1606
        %1671 = vst [vmem:[%s277 + $0xc0] sm:$0xff] %v1607
        %1672 = vst [vmem:[%s277 + $0xc8] sm:$0xff] %v1608
        %1673 = vst [vmem:[%s277 + $0xd0] sm:$0xff] %v1609
        %1674 = vst [vmem:[%s277 + $0xd8] sm:$0xff] %v1610
        %1675 = vst [vmem:[%s277 + $0xe0] sm:$0xff] %v1611
        %1676 = vst [vmem:[%s277 + $0xe8] sm:$0xff] %v1612
        %1677 = vst [vmem:[%s277 + $0xf0] sm:$0xff] %v1613
        %1678 = vst [vmem:[%s277 + $0xf8] sm:$0xff] %v1614
        %1679 = vst [vmem:[%s277 + $0x100] sm:$0xff] %v1615
        %1680 = vst [vmem:[%s277 + $0x108] sm:$0xff] %v1616
        %1681 = vst [vmem:[%s277 + $0x110] sm:$0xff] %v1617
        %1682 = vst [vmem:[%s277 + $0x118] sm:$0xff] %v1618
        %1683 = vst [vmem:[%s277 + $0x120] sm:$0xff] %v1619
        %1684 = vst [vmem:[%s277 + $0x128] sm:$0xff] %v1620
        %1685 = vst [vmem:[%s277 + $0x130] sm:$0xff] %v1621
        %1686 = vst [vmem:[%s277 + $0x138] sm:$0xff] %v1622
        %1687 = vst [vmem:[%s277 + $0x140] sm:$0xff] %v1623
        %1688 = vst [vmem:[%s277 + $0x148] sm:$0xff] %v1624
        %1689 = vst [vmem:[%s277 + $0x150] sm:$0xff] %v1625
        %1690 = vst [vmem:[%s277 + $0x158] sm:$0xff] %v1626
        %1691 = vst [vmem:[%s277 + $0x160] sm:$0xff] %v1627
        %1692 = vst [vmem:[%s277 + $0x168] sm:$0xff] %v1628
        %1693 = vst [vmem:[%s277 + $0x170] sm:$0xff] %v1629
        %1694 = vst [vmem:[%s277 + $0x178] sm:$0xff] %v1630
        %1695 = vst [vmem:[%s277 + $0x180] sm:$0xff] %v1631
        %1696 = vst [vmem:[%s277 + $0x188] sm:$0xff] %v1632
        %1697 = vst [vmem:[%s277 + $0x190] sm:$0xff] %v1633
        %1698 = vst [vmem:[%s277 + $0x198] sm:$0xff] %v1634
        %1699 = vst [vmem:[%s277 + $0x1a0] sm:$0xff] %v1635
        %1700 = vst [vmem:[%s277 + $0x1a8] sm:$0xff] %v1636
        %1701 = vst [vmem:[%s277 + $0x1b0] sm:$0xff] %v1637
        %1702 = vst [vmem:[%s277 + $0x1b8] sm:$0xff] %v1638
        %1703 = vst [vmem:[%s277 + $0x1c0] sm:$0xff] %v1639
        %1704 = vst [vmem:[%s277 + $0x1c8] sm:$0xff] %v1640
        %1705 = vst [vmem:[%s277 + $0x1d0] sm:$0xff] %v1641
        %1706 = vst [vmem:[%s277 + $0x1d8] sm:$0xff] %v1642
        %1707 = vst [vmem:[%s277 + $0x1e0] sm:$0xff] %v1643
        %1708 = vst [vmem:[%s277 + $0x1e8] sm:$0xff] %v1644
        %1709 = vst [vmem:[%s277 + $0x1f0] sm:$0xff] %v1645
        %1710 = vst [vmem:[%s277 + $0x1f8] sm:$0xff] %v1646
        %s1711 = sand.u32 %s132, 1
        %s1712 = scalar_lea.sflag [#allocation4], %s1711
        %s1713 = sand.u32 %s132, 1
        %s1714 = smul.addr %s1713, 512
        %s1715 = scalar_lea.vmem [#allocation8], %s1714
        // Predicated region
        $region49: #{tpu_custom_call.1} parent=31 // pred_check
          %p1716 = pneg %p142
        $region50: #{tpu_custom_call.1} parent=31 // pred_check_branch
          %1718 = sbr.rel (%p1716) target = $region52
        $region51: #{tpu_custom_call.1} parent=31 // pred_region
          %s1719 = smul.u32 32, %s26
          %s1720 = smul.u32 2, %s27
          %s1722 = ssub.s32 8192, 8192
          %1723 = vsyncadd %s1712, %s1722
          %s1724 = smul.addr %s1719, 4
          %s1725 = sadd.s32 %s1720, %s1724
          %s1726 = smul.addr %s1725, 128
          %s1727 = scalar_lea.hbm %s3, %s1726
          %s1728 = sshll.u32 %s1715, 4
          %s1729 = int_to_ptr.vmem [resolvable:$true] %s1728
          %1734 = dma.vmem_to_hbm [thread:$0]  %s1729, 8192, %s1727, %s1712, 256, 512, 16
        $region52: #{tpu_custom_call.1} parent=31 // pred_fallthru
          _
      $region32: #{tpu_custom_call.1} parent=5 // pred_fallthru
        _
      %p1735 = scmp.le.s32.totalorder 2, %s16
      // Predicated region
      $region53: #{tpu_custom_call.1} parent=5 // pred_check
        %p1736 = pneg %p1735
      $region54: #{tpu_custom_call.1} parent=5 // pred_check_branch
        %1738 = sbr.rel (%p1736) target = $region56
      $region55: #{tpu_custom_call.1} parent=5 // pred_region
        %s1739 = ssub.s32 %s16, 2
        // Predicated region
        $region57: #{tpu_custom_call.1} parent=55 // pred_check
          %p1740 = pneg %p148
        $region58: #{tpu_custom_call.1} parent=55 // pred_check_branch
          %1742 = sbr.rel (%p1740) target = $region60
        $region59: #{tpu_custom_call.1} parent=55 // pred_region
          %s1743 = sand.u32 %s133, 1
          %s1744 = scalar_lea.sflag [#allocation4], %s1743
          %s1745 = sand.u32 %s133, 1
          %s1746 = smul.addr %s1745, 512
          %s1747 = scalar_lea.vmem [#allocation8], %s1746
          %1748 = dma.done %s1744, 8192
        $region60: #{tpu_custom_call.1} parent=55 // pred_fallthru
          _
      $region56: #{tpu_custom_call.1} parent=5 // pred_fallthru
        _
    $region6: #{tpu_custom_call.1} parent=1 // loop_footer
      %s20 = sadd.s32 1, %s16
    $region7: #{tpu_custom_call.1} parent=1 // loop_footer_branch
      %15 = sbr.rel target = $region3
    $region8: #{tpu_custom_call.1} parent=1 // loop_exit
      _
    %1749 = vsyncpa [#allocation3], 1
    %s1750 = scalar_lea.sflag [#allocation3], 1
    %1751 = vsyncpa %s1750, 1
    %1752 = vsyncpa [#allocation6], 1
    %s1753 = scalar_lea.sflag [#allocation6], 1
    %1754 = vsyncpa %s1753, 1
    %1755 = vsyncpa [#allocation4], 1
    %s1756 = scalar_lea.sflag [#allocation4], 1
    %1757 = vsyncpa %s1756, 1

</llo_original>
